<compile_context>
chip_gen: v5e
topology: v5e:2x2
jax: 0.10.0
libtpu: 0.0.40
codegen_flags: <defaults>
</compile_context>

<pallas_src>
import functools
import math

import jax
import jax.numpy as jnp
from jax import lax
from jax.experimental import pallas as pl
from jax.experimental.pallas import tpu as pltpu


# --------------------------------------------------------------------------- util
def _layernorm(x, gamma, beta, eps=1e-5):
    mu = jnp.mean(x, axis=-1, keepdims=True)
    var = jnp.mean((x - mu) ** 2, axis=-1, keepdims=True)
    return (x - mu) * lax.rsqrt(var + eps) * gamma + beta


def _nbytes(shape, itemsize):
    n = itemsize
    for s in shape:
        n *= s
    return n


def _vmem_limit(working_set_bytes):
    # Generous headroom, but stay below v7x's 64 MiB physical VMEM per TensorCore.
    return int(min(48 * 1024 * 1024, max(4 * working_set_bytes, 16 * 1024 * 1024)))


# --------------------------------------------- fused QKV + attention + LN + KTD MLP
def _make_fused_kernel(emit_attn):
    def kernel(x_ref, wqkv_ref, bqkv_ref, wo_ref, bo_ref,
               n1g_ref, n1b_ref, w1_ref, b1_ref, w2_ref, b2_ref,
               n2g_ref, n2b_ref, *refs):
        if emit_attn:
            out_ref, attn_ref, qkv_scr = refs
        else:
            out_ref, qkv_scr = refs
            attn_ref = None

        i = pl.program_id(1)                       # query-tile index (inner axis)
        tq, d = out_ref.shape[1], out_ref.shape[2]

        # ---- per-batch Q/K/V projection into resident VMEM scratch.
        #      Done once on the first query tile of each batch (the x block is
        #      resident across the inner axis: index_map (b, 0, 0)).
        #      1/sqrt(D) is pre-folded into the Q columns of wqkv / bqkv.
        @pl.when(i == 0)
        def _():
            xb = x_ref[0].astype(jnp.bfloat16)                          # (L, D)
            qkv = jnp.dot(xb, wqkv_ref[...],
                          preferred_element_type=jnp.float32) + bqkv_ref[...]
            qkv_scr[...] = qkv.astype(qkv_scr.dtype)                    # (L, 3D) bf16

        row = pl.ds(pl.multiple_of(i * tq, tq), tq)
        q = qkv_scr[row, 0:d]                                           # (TQ, D) bf16
        k = qkv_scr[:, d:2 * d]                                         # (L,  D) bf16
        v = qkv_scr[:, 2 * d:3 * d]                                     # (L,  D) bf16

        # ---- attention scores: contract last dims directly (no k.T / XLU transpose)
        scores = lax.dot_general(q, k, (((1,), (1,)), ((), ())),
                                 preferred_element_type=jnp.float32)    # (TQ, L)

        # ---- row softmax in f32 (exact over the full K row of this query tile)
        m = jnp.max(scores, axis=-1, keepdims=True)
        e = jnp.exp(scores - m)
        denom = jnp.sum(e, axis=-1, keepdims=True)
        attn = e * pl.reciprocal(denom, approx=True)                    # EUP reciprocal
        attn_b = attn.astype(jnp.bfloat16)

        ctx = jnp.dot(attn_b, v, preferred_element_type=jnp.float32)    # (TQ, D)
        new_x = jnp.dot(ctx.astype(jnp.bfloat16), wo_ref[...],
                        preferred_element_type=jnp.float32) + bo_ref[...]

        # ---- residual (original f32 x) + norm1 (dropout == identity in eval mode)
        x_tile = x_ref[0, row, :]                                       # (TQ, D) f32
        y = _layernorm(x_tile + new_x, n1g_ref[...], n1b_ref[...])

        # ---- ktd MLP  D -> F -> D with ReLU
        h = jnp.dot(y.astype(jnp.bfloat16), w1_ref[...],
                    preferred_element_type=jnp.float32) + b1_ref[...]
        h = jnp.maximum(h, 0.0)
        ktd = jnp.dot(h.astype(jnp.bfloat16), w2_ref[...],
                      preferred_element_type=jnp.float32) + b2_ref[...]

        # ---- residual + norm2
        out = _layernorm(y + ktd, n2g_ref[...], n2b_ref[...])

        out_ref[0] = out.astype(out_ref.dtype)
        if emit_attn:
            attn_ref[0] = attn_b.astype(attn_ref.dtype)

    return kernel


# ----------------------------------------------------------------------- wrapper
def vc_encoder_layer(x, params, *, tq=128, return_attn=True):
    """x: (B, L, D) float32. params: dict of f32 parameters (cast here)."""
    B, L, D = x.shape
    F = params["w1"].shape[1]
    BF = jnp.bfloat16

    # TODO(synk): masked/padded tail tiles for L not divisible by tq.
    TQ = tq if L % tq == 0 else L
    NQ = L // TQ

    # -------- parameter prep: fuse QKV weights, fold in the softmax scale
    scale = 1.0 / math.sqrt(D)
    wqkv = jnp.concatenate([params["wq"] * scale, params["wk"], params["wv"]],
                           axis=1).astype(BF)                       # (D, 3D)
    bqkv = jnp.concatenate([params["bq"] * scale, params["bk"], params["bv"]],
                           axis=1).astype(jnp.float32)              # (1, 3D)
    wo = params["wo"].astype(BF)
    w1 = params["w1"].astype(BF)
    w2 = params["w2"].astype(BF)

    def constw(shape):
        return pl.BlockSpec(shape, lambda b, i: (0, 0),
                            pipeline_mode=pl.Buffered(buffer_count=1))

    x_spec = pl.BlockSpec((1, L, D), lambda b, i: (b, 0, 0))        # resident per batch
    out_spec = pl.BlockSpec((1, TQ, D), lambda b, i: (b, i, 0))
    attn_spec = pl.BlockSpec((1, TQ, L), lambda b, i: (b, i, 0))

    out_shapes = [jax.ShapeDtypeStruct((B, L, D), jnp.float32)]
    out_specs = [out_spec]
    if return_attn:
        out_shapes.append(jax.ShapeDtypeStruct((B, L, L), BF))
        out_specs.append(attn_spec)

    ws = (2 * (_nbytes((1, L, D), 4) + _nbytes((1, TQ, D), 4)
               + (_nbytes((1, TQ, L), 2) if return_attn else 0))    # pipelined I/O
          + _nbytes((D, 3 * D), 2) + _nbytes((D, D), 2)             # weights
          + _nbytes((D, F), 2) + _nbytes((F, D), 2)
          + _nbytes((L, 3 * D), 2)                                  # qkv scratch
          + _nbytes((L, 3 * D), 4)                                  # f32 qkv acc
          + 6 * _nbytes((TQ, L), 4) + 2 * _nbytes((TQ, F), 4)       # temporaries
          + 12 * _nbytes((1, max(D, F)), 4))

    cost = pl.CostEstimate(
        flops=2 * B * L * (3 * D * D + 2 * L * D + D * D + 2 * D * F),
        transcendentals=B * L * L,
        bytes_accessed=(2 * _nbytes((B, L, D), 4)                   # x in, out
                        + (_nbytes((B, L, L), 2) if return_attn else 0)
                        + _nbytes((D, 3 * D), 2) + _nbytes((D, D), 2)
                        + _nbytes((D, F), 2) + _nbytes((F, D), 2)),
    )

    results = pl.pallas_call(
        _make_fused_kernel(return_attn),
        out_shape=tuple(out_shapes),
        grid=(B, NQ),
        in_specs=[x_spec,
                  constw((D, 3 * D)), constw((1, 3 * D)),           # wqkv, bqkv
                  constw((D, D)), constw((1, D)),                   # wo, bo
                  constw((1, D)), constw((1, D)),                   # norm1 gamma, beta
                  constw((D, F)), constw((1, F)),                   # w1, b1
                  constw((F, D)), constw((1, D)),                   # w2, b2
                  constw((1, D)), constw((1, D))],                  # norm2 gamma, beta
        out_specs=tuple(out_specs),
        scratch_shapes=[pltpu.VMEM((L, 3 * D), BF)],                # per-batch Q/K/V
        compiler_params=pltpu.CompilerParams(
            dimension_semantics=("parallel", "arbitrary"),
            vmem_limit_bytes=_vmem_limit(ws)),
        cost_estimate=cost,
    )(x, wqkv, bqkv, wo, params["bo"], params["n1g"], params["n1b"],
      w1, params["b1"], w2, params["b2"], params["n2g"], params["n2b"])

    if return_attn:
        return results[0], results[1]
    return results[0], None


# --------------------------------------------------------------------- reference
def vc_encoder_layer_ref(x, params):
    """Pure-JAX reference mirroring the kernel's precision strategy
    (bf16 MXU inputs / f32 accumulation, f32 softmax, LayerNorm & residual)."""
    f32 = jnp.float32
    BF = jnp.bfloat16
    bf = lambda a: a.astype(BF).astype(f32)
    D = x.shape[-1]
    scale = 1.0 / math.sqrt(D)

    wqkv = jnp.concatenate([params["wq"] * scale, params["wk"], params["wv"]],
                           axis=1).astype(BF).astype(f32)
    bqkv = jnp.concatenate([params["bq"] * scale, params["bk"], params["bv"]],
                           axis=1).astype(f32)
    wo, w1, w2 = bf(params["wo"]), bf(params["w1"]), bf(params["w2"])

    xb = bf(x)
    qkv = bf(jnp.einsum("bld,de->ble", xb, wqkv) + bqkv)     # bf16 scratch mirrored
    q, k, v = qkv[..., :D], qkv[..., D:2 * D], qkv[..., 2 * D:]

    scores = jnp.einsum("bld,bmd->blm", q, k)                # scale folded into q
    attn = jax.nn.softmax(scores, axis=-1)
    attn_b = attn.astype(BF)

    ctx = jnp.einsum("blm,bmd->bld", attn_b.astype(f32), v)
    new_x = bf(ctx) @ wo + params["bo"]

    y = _layernorm(x + new_x, params["n1g"], params["n1b"])  # original f32 residual

    h = jnp.maximum(bf(y) @ w1 + params["b1"], 0.0)
    ktd = bf(h) @ w2 + params["b2"]
    out = _layernorm(y + ktd, params["n2g"], params["n2b"])
    return out, attn_b


# ------------------------------------------------------------------------- init
def init_params(key, d_model, d_ff):
    ks = jax.random.split(key, 8)
    s = 0.05
    f32 = jnp.float32
    normal = lambda k, shape: s * jax.random.normal(k, shape, f32)
    return {
        "wq": normal(ks[0], (d_model, d_model)),
        "wk": normal(ks[1], (d_model, d_model)),
        "wv": normal(ks[2], (d_model, d_model)),
        "wo": normal(ks[3], (d_model, d_model)),
        "bq": normal(ks[4], (1, d_model)),
        "bk": jnp.zeros((1, d_model), f32),
        "bv": jnp.zeros((1, d_model), f32),
        "bo": jnp.zeros((1, d_model), f32),
        "n1g": jnp.ones((1, d_model), f32),
        "n1b": jnp.zeros((1, d_model), f32),
        "w1": normal(ks[5], (d_model, d_ff)),
        "b1": normal(ks[6], (1, d_ff)),
        "w2": normal(ks[7], (d_ff, d_model)),
        "b2": jnp.zeros((1, d_model), f32),
        "n2g": jnp.ones((1, d_model), f32),
        "n2b": jnp.zeros((1, d_model), f32),
    }


if __name__ == "__main__":
    # Small but lane-dense / (8,128)-aligned shapes: D and L multiples of 128.
    B, L, d_model, d_ff = 2, 128, 128, 256

    key = jax.random.PRNGKey(0)
    kx, kp = jax.random.split(key)
    x = jax.random.normal(kx, (B, L, d_model), jnp.float32)
    params = init_params(kp, d_model, d_ff)

    fwd = jax.jit(functools.partial(vc_encoder_layer, tq=128, return_attn=True))
    out, attn = fwd(x, params)
    out = jax.block_until_ready(out)
    attn = jax.block_until_ready(attn)

    out_ref, attn_ref = vc_encoder_layer_ref(x, params)
    assert out.shape == (B, L, d_model) and attn.shape == (B, L, L)
    assert jnp.allclose(out, out_ref, atol=5e-3, rtol=5e-3)
    assert jnp.allclose(attn.astype(jnp.float32), attn_ref.astype(jnp.float32),
                        atol=5e-3, rtol=5e-2)

    print("KERNEL_OK")
</pallas_src>

<mosaic_0001>
module attributes {stable_mosaic.version = 11 : i64} {
  func.func @kernel(%arg0: i32, %arg1: i32, %arg2: memref<1x128x128xf32, #tpu.memory_space<vmem>>, %arg3: memref<128x384xbf16, #tpu.memory_space<vmem>>, %arg4: memref<1x384xf32, #tpu.memory_space<vmem>>, %arg5: memref<128x128xbf16, #tpu.memory_space<vmem>>, %arg6: memref<1x128xf32, #tpu.memory_space<vmem>>, %arg7: memref<1x128xf32, #tpu.memory_space<vmem>>, %arg8: memref<1x128xf32, #tpu.memory_space<vmem>>, %arg9: memref<128x256xbf16, #tpu.memory_space<vmem>>, %arg10: memref<1x256xf32, #tpu.memory_space<vmem>>, %arg11: memref<256x128xbf16, #tpu.memory_space<vmem>>, %arg12: memref<1x128xf32, #tpu.memory_space<vmem>>, %arg13: memref<1x128xf32, #tpu.memory_space<vmem>>, %arg14: memref<1x128xf32, #tpu.memory_space<vmem>>, %arg15: memref<1x128x128xf32, #tpu.memory_space<vmem>>, %arg16: memref<1x128x128xbf16, #tpu.memory_space<vmem>>, %arg17: memref<128x384xbf16, #tpu.memory_space<vmem>>) attributes {dimension_semantics = [#tpu.dimension_semantics<parallel>, #tpu.dimension_semantics<arbitrary>], iteration_bounds = array<i64: 2, 1>, scalar_prefetch = 0 : i64, scratch_operands = 1 : i64, tpu.core_type = #tpu.core_type<tc>, window_params = [{transform_indices = @transform_0, window_bounds = array<i64: 1, 128, 128>}, {pipeline_mode = #tpu.pipeline_mode<synchronous>, transform_indices = @transform_1, window_bounds = array<i64: 128, 384>}, {pipeline_mode = #tpu.pipeline_mode<synchronous>, transform_indices = @transform_2, window_bounds = array<i64: 1, 384>}, {pipeline_mode = #tpu.pipeline_mode<synchronous>, transform_indices = @transform_3, window_bounds = array<i64: 128, 128>}, {pipeline_mode = #tpu.pipeline_mode<synchronous>, transform_indices = @transform_4, window_bounds = array<i64: 1, 128>}, {pipeline_mode = #tpu.pipeline_mode<synchronous>, transform_indices = @transform_5, window_bounds = array<i64: 1, 128>}, {pipeline_mode = #tpu.pipeline_mode<synchronous>, transform_indices = @transform_6, window_bounds = array<i64: 1, 128>}, {pipeline_mode = #tpu.pipeline_mode<synchronous>, transform_indices = @transform_7, window_bounds = array<i64: 128, 256>}, {pipeline_mode = #tpu.pipeline_mode<synchronous>, transform_indices = @transform_8, window_bounds = array<i64: 1, 256>}, {pipeline_mode = #tpu.pipeline_mode<synchronous>, transform_indices = @transform_9, window_bounds = array<i64: 256, 128>}, {pipeline_mode = #tpu.pipeline_mode<synchronous>, transform_indices = @transform_10, window_bounds = array<i64: 1, 128>}, {pipeline_mode = #tpu.pipeline_mode<synchronous>, transform_indices = @transform_11, window_bounds = array<i64: 1, 128>}, {pipeline_mode = #tpu.pipeline_mode<synchronous>, transform_indices = @transform_12, window_bounds = array<i64: 1, 128>}, {transform_indices = @transform_13, window_bounds = array<i64: 1, 128, 128>}, {transform_indices = @transform_14, window_bounds = array<i64: 1, 128, 128>}]} {
    %c0_i32 = arith.constant 0 : i32
    %0 = arith.cmpi eq, %arg1, %c0_i32 : i32
    %1 = arith.extui %0 : i1 to i32
    %c0_i32_0 = arith.constant 0 : i32
    %2 = arith.cmpi ne, %1, %c0_i32_0 : i32
    scf.if %2 {
      %c0_48 = arith.constant 0 : index
      %c0_49 = arith.constant 0 : index
      %c0_50 = arith.constant 0 : index
      %101 = vector.load %arg2[%c0_48, %c0_49, %c0_50] : memref<1x128x128xf32, #tpu.memory_space<vmem>>, vector<1x128x128xf32>
      %102 = vector.shape_cast %101 : vector<1x128x128xf32> to vector<128x128xf32>
      %103 = arith.truncf %102 : vector<128x128xf32> to vector<128x128xbf16>
      %c0_51 = arith.constant 0 : index
      %c0_52 = arith.constant 0 : index
      %104 = vector.load %arg3[%c0_51, %c0_52] : memref<128x384xbf16, #tpu.memory_space<vmem>>, vector<128x384xbf16>
      %cst_53 = arith.constant dense<0.000000e+00> : vector<128x384xf32>
      %105 = tpu.matmul %103, %104, %cst_53 {dimension_numbers = #tpu.dot_dimension_numbers<[1], [0], [0], [1], [0, 0, 1, 1], [], []>} : vector<128x128xbf16>, vector<128x384xbf16>, vector<128x384xf32> -> vector<128x384xf32>
      %c0_54 = arith.constant 0 : index
      %c0_55 = arith.constant 0 : index
      %106 = vector.load %arg4[%c0_54, %c0_55] : memref<1x384xf32, #tpu.memory_space<vmem>>, vector<1x384xf32>
      %107 = vector.broadcast %106 : vector<1x384xf32> to vector<128x384xf32>
      %108 = arith.addf %105, %107 : vector<128x384xf32>
      %109 = arith.truncf %108 : vector<128x384xf32> to vector<128x384xbf16>
      %c0_56 = arith.constant 0 : index
      %c0_57 = arith.constant 0 : index
      %110 = vector.load %arg17[%c0_56, %c0_57] : memref<128x384xbf16, #tpu.memory_space<vmem>>, vector<128x384xbf16>
      tpu.vector_store %arg17[%c0_56, %c0_57], %109 {strides = array<i32>} : memref<128x384xbf16, #tpu.memory_space<vmem>>, vector<128x384xbf16>,
    } else {
    }
    %c128_i32 = arith.constant 128 : i32
    %3 = arith.muli %arg1, %c128_i32 : i32
    %4 = tpu.assume_multiple %3, 128 : i32
    %5 = arith.index_cast %4 : i32 to index
    %c0 = arith.constant 0 : index
    %6 = vector.load %arg17[%5, %c0] : memref<128x384xbf16, #tpu.memory_space<vmem>>, vector<128x128xbf16>
    %c0_1 = arith.constant 0 : index
    %c128 = arith.constant 128 : index
    %7 = vector.load %arg17[%c0_1, %c128] : memref<128x384xbf16, #tpu.memory_space<vmem>>, vector<128x128xbf16>
    %c0_2 = arith.constant 0 : index
    %c256 = arith.constant 256 : index
    %8 = vector.load %arg17[%c0_2, %c256] : memref<128x384xbf16, #tpu.memory_space<vmem>>, vector<128x128xbf16>
    %cst = arith.constant dense<0.000000e+00> : vector<128x128xf32>
    %9 = tpu.matmul %6, %7, %cst {dimension_numbers = #tpu.dot_dimension_numbers<[1], [1], [0], [0], [0, 0, 1, 0], [], []>} : vector<128x128xbf16>, vector<128x128xbf16>, vector<128x128xf32> -> vector<128x128xf32>
    %cst_3 = arith.constant dense<0xFF800000> : vector<128xf32>
    %10 = vector.multi_reduction <maximumf>, %9, %cst_3 [1] : vector<128x128xf32> to vector<128xf32>
    %11 = vector.shape_cast %10 : vector<128xf32> to vector<128x1xf32>
    %12 = vector.broadcast %11 : vector<128x1xf32> to vector<128x128xf32>
    %13 = arith.subf %9, %12 : vector<128x128xf32>
    %14 = math.exp %13 : vector<128x128xf32>
    %cst_4 = arith.constant dense<0.000000e+00> : vector<128xf32>
    %15 = vector.multi_reduction <add>, %14, %cst_4 [1] : vector<128x128xf32> to vector<128xf32>
    %16 = vector.shape_cast %15 : vector<128xf32> to vector<128x1xf32>
    %17 = tpu.reciprocal %16 {approx = true} : vector<128x1xf32> -> vector<128x1xf32>
    %18 = vector.broadcast %17 : vector<128x1xf32> to vector<128x128xf32>
    %19 = arith.mulf %14, %18 : vector<128x128xf32>
    %20 = arith.truncf %19 : vector<128x128xf32> to vector<128x128xbf16>
    %cst_5 = arith.constant dense<0.000000e+00> : vector<128x128xf32>
    %21 = tpu.matmul %20, %8, %cst_5 {dimension_numbers = #tpu.dot_dimension_numbers<[1], [0], [0], [1], [0, 0, 1, 1], [], []>} : vector<128x128xbf16>, vector<128x128xbf16>, vector<128x128xf32> -> vector<128x128xf32>
    %22 = arith.truncf %21 : vector<128x128xf32> to vector<128x128xbf16>
    %c0_6 = arith.constant 0 : index
    %c0_7 = arith.constant 0 : index
    %23 = vector.load %arg5[%c0_6, %c0_7] : memref<128x128xbf16, #tpu.memory_space<vmem>>, vector<128x128xbf16>
    %cst_8 = arith.constant dense<0.000000e+00> : vector<128x128xf32>
    %24 = tpu.matmul %22, %23, %cst_8 {dimension_numbers = #tpu.dot_dimension_numbers<[1], [0], [0], [1], [0, 0, 1, 1], [], []>} : vector<128x128xbf16>, vector<128x128xbf16>, vector<128x128xf32> -> vector<128x128xf32>
    %c0_9 = arith.constant 0 : index
    %c0_10 = arith.constant 0 : index
    %25 = vector.load %arg6[%c0_9, %c0_10] : memref<1x128xf32, #tpu.memory_space<vmem>>, vector<1x128xf32>
    %26 = vector.broadcast %25 : vector<1x128xf32> to vector<128x128xf32>
    %27 = arith.addf %24, %26 : vector<128x128xf32>
    %c0_11 = arith.constant 0 : index
    %28 = arith.index_cast %4 : i32 to index
    %c0_12 = arith.constant 0 : index
    %29 = vector.load %arg2[%c0_11, %28, %c0_12] : memref<1x128x128xf32, #tpu.memory_space<vmem>>, vector<1x128x128xf32>
    %30 = vector.shape_cast %29 : vector<1x128x128xf32> to vector<128x128xf32>
    %31 = arith.addf %30, %27 : vector<128x128xf32>
    %c0_13 = arith.constant 0 : index
    %c0_14 = arith.constant 0 : index
    %32 = vector.load %arg7[%c0_13, %c0_14] : memref<1x128xf32, #tpu.memory_space<vmem>>, vector<1x128xf32>
    %c0_15 = arith.constant 0 : index
    %c0_16 = arith.constant 0 : index
    %33 = vector.load %arg8[%c0_15, %c0_16] : memref<1x128xf32, #tpu.memory_space<vmem>>, vector<1x128xf32>
    %cst_17 = arith.constant dense<0.000000e+00> : vector<128xf32>
    %34 = vector.multi_reduction <add>, %31, %cst_17 [1] : vector<128x128xf32> to vector<128xf32>
    %35 = vector.shape_cast %34 : vector<128xf32> to vector<128x1xf32>
    %cst_18 = arith.constant 1.280000e+02 : f32
    %36 = vector.broadcast %cst_18 : f32 to vector<128x1xf32>
    %37 = arith.divf %35, %36 : vector<128x1xf32>
    %38 = vector.broadcast %37 : vector<128x1xf32> to vector<128x128xf32>
    %39 = arith.subf %31, %38 : vector<128x128xf32>
    %40 = arith.mulf %39, %39 : vector<128x128xf32>
    %cst_19 = arith.constant dense<0.000000e+00> : vector<128xf32>
    %41 = vector.multi_reduction <add>, %40, %cst_19 [1] : vector<128x128xf32> to vector<128xf32>
    %42 = vector.shape_cast %41 : vector<128xf32> to vector<128x1xf32>
    %cst_20 = arith.constant 1.280000e+02 : f32
    %43 = vector.broadcast %cst_20 : f32 to vector<128x1xf32>
    %44 = arith.divf %42, %43 : vector<128x1xf32>
    %45 = vector.broadcast %37 : vector<128x1xf32> to vector<128x128xf32>
    %46 = arith.subf %31, %45 : vector<128x128xf32>
    %cst_21 = arith.constant 9.99999974E-6 : f32
    %47 = vector.broadcast %cst_21 : f32 to vector<128x1xf32>
    %48 = arith.addf %44, %47 : vector<128x1xf32>
    %49 = math.rsqrt %48 : vector<128x1xf32>
    %50 = vector.broadcast %49 : vector<128x1xf32> to vector<128x128xf32>
    %51 = arith.mulf %46, %50 : vector<128x128xf32>
    %52 = vector.broadcast %32 : vector<1x128xf32> to vector<128x128xf32>
    %53 = arith.mulf %51, %52 : vector<128x128xf32>
    %54 = vector.broadcast %33 : vector<1x128xf32> to vector<128x128xf32>
    %55 = arith.addf %53, %54 : vector<128x128xf32>
    %56 = arith.truncf %55 : vector<128x128xf32> to vector<128x128xbf16>
    %c0_22 = arith.constant 0 : index
    %c0_23 = arith.constant 0 : index
    %57 = vector.load %arg9[%c0_22, %c0_23] : memref<128x256xbf16, #tpu.memory_space<vmem>>, vector<128x256xbf16>
    %cst_24 = arith.constant dense<0.000000e+00> : vector<128x256xf32>
    %58 = tpu.matmul %56, %57, %cst_24 {dimension_numbers = #tpu.dot_dimension_numbers<[1], [0], [0], [1], [0, 0, 1, 1], [], []>} : vector<128x128xbf16>, vector<128x256xbf16>, vector<128x256xf32> -> vector<128x256xf32>
    %c0_25 = arith.constant 0 : index
    %c0_26 = arith.constant 0 : index
    %59 = vector.load %arg10[%c0_25, %c0_26] : memref<1x256xf32, #tpu.memory_space<vmem>>, vector<1x256xf32>
    %60 = vector.broadcast %59 : vector<1x256xf32> to vector<128x256xf32>
    %61 = arith.addf %58, %60 : vector<128x256xf32>
    %cst_27 = arith.constant 0.000000e+00 : f32
    %62 = vector.broadcast %cst_27 : f32 to vector<128x256xf32>
    %63 = arith.maximumf %61, %62 : vector<128x256xf32>
    %64 = arith.truncf %63 : vector<128x256xf32> to vector<128x256xbf16>
    %c0_28 = arith.constant 0 : index
    %c0_29 = arith.constant 0 : index
    %65 = vector.load %arg11[%c0_28, %c0_29] : memref<256x128xbf16, #tpu.memory_space<vmem>>, vector<256x128xbf16>
    %cst_30 = arith.constant dense<0.000000e+00> : vector<128x128xf32>
    %66 = tpu.matmul %64, %65, %cst_30 {dimension_numbers = #tpu.dot_dimension_numbers<[1], [0], [0], [1], [0, 0, 1, 1], [], []>} : vector<128x256xbf16>, vector<256x128xbf16>, vector<128x128xf32> -> vector<128x128xf32>
    %c0_31 = arith.constant 0 : index
    %c0_32 = arith.constant 0 : index
    %67 = vector.load %arg12[%c0_31, %c0_32] : memref<1x128xf32, #tpu.memory_space<vmem>>, vector<1x128xf32>
    %68 = vector.broadcast %67 : vector<1x128xf32> to vector<128x128xf32>
    %69 = arith.addf %66, %68 : vector<128x128xf32>
    %70 = arith.addf %55, %69 : vector<128x128xf32>
    %c0_33 = arith.constant 0 : index
    %c0_34 = arith.constant 0 : index
    %71 = vector.load %arg13[%c0_33, %c0_34] : memref<1x128xf32, #tpu.memory_space<vmem>>, vector<1x128xf32>
    %c0_35 = arith.constant 0 : index
    %c0_36 = arith.constant 0 : index
    %72 = vector.load %arg14[%c0_35, %c0_36] : memref<1x128xf32, #tpu.memory_space<vmem>>, vector<1x128xf32>
    %cst_37 = arith.constant dense<0.000000e+00> : vector<128xf32>
    %73 = vector.multi_reduction <add>, %70, %cst_37 [1] : vector<128x128xf32> to vector<128xf32>
    %74 = vector.shape_cast %73 : vector<128xf32> to vector<128x1xf32>
    %cst_38 = arith.constant 1.280000e+02 : f32
    %75 = vector.broadcast %cst_38 : f32 to vector<128x1xf32>
    %76 = arith.divf %74, %75 : vector<128x1xf32>
    %77 = vector.broadcast %76 : vector<128x1xf32> to vector<128x128xf32>
    %78 = arith.subf %70, %77 : vector<128x128xf32>
    %79 = arith.mulf %78, %78 : vector<128x128xf32>
    %cst_39 = arith.constant dense<0.000000e+00> : vector<128xf32>
    %80 = vector.multi_reduction <add>, %79, %cst_39 [1] : vector<128x128xf32> to vector<128xf32>
    %81 = vector.shape_cast %80 : vector<128xf32> to vector<128x1xf32>
    %cst_40 = arith.constant 1.280000e+02 : f32
    %82 = vector.broadcast %cst_40 : f32 to vector<128x1xf32>
    %83 = arith.divf %81, %82 : vector<128x1xf32>
    %84 = vector.broadcast %76 : vector<128x1xf32> to vector<128x128xf32>
    %85 = arith.subf %70, %84 : vector<128x128xf32>
    %cst_41 = arith.constant 9.99999974E-6 : f32
    %86 = vector.broadcast %cst_41 : f32 to vector<128x1xf32>
    %87 = arith.addf %83, %86 : vector<128x1xf32>
    %88 = math.rsqrt %87 : vector<128x1xf32>
    %89 = vector.broadcast %88 : vector<128x1xf32> to vector<128x128xf32>
    %90 = arith.mulf %85, %89 : vector<128x128xf32>
    %91 = vector.broadcast %71 : vector<1x128xf32> to vector<128x128xf32>
    %92 = arith.mulf %90, %91 : vector<128x128xf32>
    %93 = vector.broadcast %72 : vector<1x128xf32> to vector<128x128xf32>
    %94 = arith.addf %92, %93 : vector<128x128xf32>
    %c0_42 = arith.constant 0 : index
    %c0_43 = arith.constant 0 : index
    %c0_44 = arith.constant 0 : index
    %95 = vector.load %arg15[%c0_42, %c0_43, %c0_44] : memref<1x128x128xf32, #tpu.memory_space<vmem>>, vector<1x128x128xf32>
    %96 = vector.shape_cast %95 : vector<1x128x128xf32> to vector<128x128xf32>
    %97 = vector.shape_cast %94 : vector<128x128xf32> to vector<1x128x128xf32>
    tpu.vector_store %arg15[%c0_42, %c0_43, %c0_44], %97 {strides = array<i32>} : memref<1x128x128xf32, #tpu.memory_space<vmem>>, vector<1x128x128xf32>,
    %c0_45 = arith.constant 0 : index
    %c0_46 = arith.constant 0 : index
    %c0_47 = arith.constant 0 : index
    %98 = vector.load %arg16[%c0_45, %c0_46, %c0_47] : memref<1x128x128xbf16, #tpu.memory_space<vmem>>, vector<1x128x128xbf16>
    %99 = vector.shape_cast %98 : vector<1x128x128xbf16> to vector<128x128xbf16>
    %100 = vector.shape_cast %20 : vector<128x128xbf16> to vector<1x128x128xbf16>
    tpu.vector_store %arg16[%c0_45, %c0_46, %c0_47], %100 {strides = array<i32>} : memref<1x128x128xbf16, #tpu.memory_space<vmem>>, vector<1x128x128xbf16>,
    return
  }
  func.func @transform_0(%arg0: i32, %arg1: i32) -> (i32, i32, i32) {
    %c0_i32 = arith.constant 0 : i32
    %c0_i32_0 = arith.constant 0 : i32
    %c0_i32_1 = arith.constant 0 : i32
    return %arg0, %c0_i32, %c0_i32_0 : i32, i32, i32
  }
  func.func @transform_1(%arg0: i32, %arg1: i32) -> (i32, i32) {
    %c0_i32 = arith.constant 0 : i32
    %c0_i32_0 = arith.constant 0 : i32
    %c0_i32_1 = arith.constant 0 : i32
    return %c0_i32, %c0_i32_0 : i32, i32
  }
  func.func @transform_2(%arg0: i32, %arg1: i32) -> (i32, i32) {
    %c0_i32 = arith.constant 0 : i32
    %c0_i32_0 = arith.constant 0 : i32
    %c0_i32_1 = arith.constant 0 : i32
    return %c0_i32, %c0_i32_0 : i32, i32
  }
  func.func @transform_3(%arg0: i32, %arg1: i32) -> (i32, i32) {
    %c0_i32 = arith.constant 0 : i32
    %c0_i32_0 = arith.constant 0 : i32
    %c0_i32_1 = arith.constant 0 : i32
    return %c0_i32, %c0_i32_0 : i32, i32
  }
  func.func @transform_4(%arg0: i32, %arg1: i32) -> (i32, i32) {
    %c0_i32 = arith.constant 0 : i32
    %c0_i32_0 = arith.constant 0 : i32
    %c0_i32_1 = arith.constant 0 : i32
    return %c0_i32, %c0_i32_0 : i32, i32
  }
  func.func @transform_5(%arg0: i32, %arg1: i32) -> (i32, i32) {
    %c0_i32 = arith.constant 0 : i32
    %c0_i32_0 = arith.constant 0 : i32
    %c0_i32_1 = arith.constant 0 : i32
    return %c0_i32, %c0_i32_0 : i32, i32
  }
  func.func @transform_6(%arg0: i32, %arg1: i32) -> (i32, i32) {
    %c0_i32 = arith.constant 0 : i32
    %c0_i32_0 = arith.constant 0 : i32
    %c0_i32_1 = arith.constant 0 : i32
    return %c0_i32, %c0_i32_0 : i32, i32
  }
  func.func @transform_7(%arg0: i32, %arg1: i32) -> (i32, i32) {
    %c0_i32 = arith.constant 0 : i32
    %c0_i32_0 = arith.constant 0 : i32
    %c0_i32_1 = arith.constant 0 : i32
    return %c0_i32, %c0_i32_0 : i32, i32
  }
  func.func @transform_8(%arg0: i32, %arg1: i32) -> (i32, i32) {
    %c0_i32 = arith.constant 0 : i32
    %c0_i32_0 = arith.constant 0 : i32
    %c0_i32_1 = arith.constant 0 : i32
    return %c0_i32, %c0_i32_0 : i32, i32
  }
  func.func @transform_9(%arg0: i32, %arg1: i32) -> (i32, i32) {
    %c0_i32 = arith.constant 0 : i32
    %c0_i32_0 = arith.constant 0 : i32
    %c0_i32_1 = arith.constant 0 : i32
    return %c0_i32, %c0_i32_0 : i32, i32
  }
  func.func @transform_10(%arg0: i32, %arg1: i32) -> (i32, i32) {
    %c0_i32 = arith.constant 0 : i32
    %c0_i32_0 = arith.constant 0 : i32
    %c0_i32_1 = arith.constant 0 : i32
    return %c0_i32, %c0_i32_0 : i32, i32
  }
  func.func @transform_11(%arg0: i32, %arg1: i32) -> (i32, i32) {
    %c0_i32 = arith.constant 0 : i32
    %c0_i32_0 = arith.constant 0 : i32
    %c0_i32_1 = arith.constant 0 : i32
    return %c0_i32, %c0_i32_0 : i32, i32
  }
  func.func @transform_12(%arg0: i32, %arg1: i32) -> (i32, i32) {
    %c0_i32 = arith.constant 0 : i32
    %c0_i32_0 = arith.constant 0 : i32
    %c0_i32_1 = arith.constant 0 : i32
    return %c0_i32, %c0_i32_0 : i32, i32
  }
  func.func @transform_13(%arg0: i32, %arg1: i32) -> (i32, i32, i32) {
    %c0_i32 = arith.constant 0 : i32
    %c0_i32_0 = arith.constant 0 : i32
    return %arg0, %arg1, %c0_i32 : i32, i32, i32
  }
  func.func @transform_14(%arg0: i32, %arg1: i32) -> (i32, i32, i32) {
    %c0_i32 = arith.constant 0 : i32
    %c0_i32_0 = arith.constant 0 : i32
    return %arg0, %arg1, %c0_i32 : i32, i32, i32
  }
}

</mosaic_0001>

<llo_original>
// kernel: vc_encoder_layer.1
$region0: #{vc_encoder_layer.1}
  #allocation0 [shape = 'u32[]', space=smem, size = 0x4, offset = 0x4, fixed_abs, tag = 'smem constant byte address 0x4 - core index']
  #allocation1 [shape = 'u32[72,128]{1,0:T(1,128)}', space=vmem, size = 0x9000, scoped, tag = 'internal scratch']
  #allocation2 [shape = 'bf16[128,384]{1,0:T(8,128)(2,1)}', space=vmem, size = 0x18000, scoped, tag = 'scratch operand']
  %s0 = inlined_call_operand.vmem [shape: f32[2,128,128], index: 0, kind: input, shape index: {}]
  %s1 = inlined_call_operand.vmem [shape: bf16[128,384], index: 1, kind: input, shape index: {}]
  %s2 = inlined_call_operand.vmem [shape: f32[1,384], index: 2, kind: input, shape index: {}]
  %s3 = inlined_call_operand.vmem [shape: bf16[128,128], index: 3, kind: input, shape index: {}]
  %s4 = inlined_call_operand.vmem [shape: f32[1,128], index: 4, kind: input, shape index: {}]
  %s5 = inlined_call_operand.vmem [shape: f32[1,128], index: 5, kind: input, shape index: {}]
  %s6 = inlined_call_operand.vmem [shape: f32[1,128], index: 6, kind: input, shape index: {}]
  %s7 = inlined_call_operand.vmem [shape: bf16[128,256], index: 7, kind: input, shape index: {}]
  %s8 = inlined_call_operand.vmem [shape: f32[1,256], index: 8, kind: input, shape index: {}]
  %s9 = inlined_call_operand.vmem [shape: bf16[256,128], index: 9, kind: input, shape index: {}]
  %s10 = inlined_call_operand.vmem [shape: f32[1,128], index: 10, kind: input, shape index: {}]
  %s11 = inlined_call_operand.vmem [shape: f32[1,128], index: 11, kind: input, shape index: {}]
  %s12 = inlined_call_operand.vmem [shape: f32[1,128], index: 12, kind: input, shape index: {}]
  %s13 = inlined_call_operand.hbm [shape: f32[2,128,128], index: 13, kind: output, shape index: {0}]
  %s14 = inlined_call_operand.hbm [shape: bf16[2,128,128], index: 14, kind: output, shape index: {1}]
  %15 = xla_tuple %s13, %s14
  %s16 = sld [smem:[#allocation0]]
  $region97: #{vc_encoder_layer.1} parent=0
    _
  %s18 = ssub.s32 1, %s16
  %s19 = scalar_select 0, %s18, %s16
  $region1: #{vc_encoder_layer.1} parent=0
    #allocation3 [shape = 'u8[131072]{0}', space=vmem, size = 0x20000, scoped, tag = 'output window, operand 0']
    #allocation4 [shape = 's32[2]{0}', space=sflag, size = 0x8, scoped, tag = 'scoped memory for vc_encoder_layer.1']
    #allocation5 [shape = 'u8[65536]{0}', space=vmem, size = 0x10000, scoped, tag = 'output window, operand 1']
    #allocation6 [shape = 's32[2]{0}', space=sflag, size = 0x8, scoped, tag = 'scoped memory for vc_encoder_layer.1']
    %20 = vsyncpa [#allocation4], 0
    %s21 = scalar_lea.sflag [#allocation4], 1
    %22 = vsyncpa %s21, 0
    %23 = vsyncpa [#allocation6], 0
    %s24 = scalar_lea.sflag [#allocation6], 1
    %25 = vsyncpa %s24, 0
    loop: start=0, step=1, limit=4
    $region2: #{vc_encoder_layer.1} parent=1 // loop_pre_header
      _
    $region3: #{vc_encoder_layer.1} parent=1 // loop_header
      %s27 = sphi 0, %s31
      %p28 = scmp.ge.s32.totalorder %s27, 4
      %s34 = sphi 0, %s46
      %s35 = sphi 0, %s42
      %s36 = sphi 0, %s34
      %s37 = sphi 0, %s35
      %s38 = sphi 0, %s36
      %s39 = sphi 0, %s37
      %s49 = sphi 0, %s51
      %s52 = sphi 0, %s49
      %s53 = sphi 0, %s52
      %s69 = sphi 0, %s53
      %s73 = sphi 0, %s73
      %s75 = sphi 0, %s73
      %s76 = sphi 0, %s75
      %s90 = sphi 0, %s76
      %s94 = sphi 0, %s94
      %s96 = sphi 0, %s94
      %s97 = sphi 0, %s96
      %s111 = sphi 0, %s97
      %s115 = sphi 0, %s115
      %s117 = sphi 0, %s115
      %s118 = sphi 0, %s117
      %s132 = sphi 0, %s118
      %s136 = sphi 0, %s136
      %s138 = sphi 0, %s136
      %s139 = sphi 0, %s138
      %s153 = sphi 0, %s139
      %s157 = sphi 0, %s157
      %s159 = sphi 0, %s157
      %s160 = sphi 0, %s159
      %s174 = sphi 0, %s160
      %s178 = sphi 0, %s178
      %s180 = sphi 0, %s178
      %s181 = sphi 0, %s180
      %s195 = sphi 0, %s181
      %s199 = sphi 0, %s199
      %s201 = sphi 0, %s199
      %s202 = sphi 0, %s201
      %s216 = sphi 0, %s202
      %s220 = sphi 0, %s220
      %s222 = sphi 0, %s220
      %s223 = sphi 0, %s222
      %s237 = sphi 0, %s223
      %s241 = sphi 0, %s241
      %s243 = sphi 0, %s241
      %s244 = sphi 0, %s243
      %s258 = sphi 0, %s244
      %s262 = sphi 0, %s262
      %s264 = sphi 0, %s262
      %s265 = sphi 0, %s264
      %s279 = sphi 0, %s265
      %s283 = sphi 0, %s283
      %s285 = sphi 0, %s283
      %s286 = sphi 0, %s285
      %s300 = sphi 0, %s286
      %s304 = sphi 0, %s304
      %s306 = sphi 0, %s304
      %s307 = sphi 0, %s306
      %s321 = sphi 0, %s307
      %s329 = sphi 0, %s331
      %s332 = sphi 0, %s329
      %s333 = sphi 0, %s332
      %s349 = sphi 0, %s333
      %s357 = sphi 0, %s359
      %s360 = sphi 0, %s357
      %s361 = sphi 0, %s360
      %s377 = sphi 0, %s361
    $region4: #{vc_encoder_layer.1} parent=1 // loop_header_branch
      %30 = sbr.rel (%p28) target = $region8
    $region5: #{vc_encoder_layer.1} parent=1 // loop_body
      %s32 = ssub.s32 %s27, 1
      %s33 = ssub.s32 %s27, 2
      %s40 = sadd.s32 1, %s35
      %p41 = scmp.ge.s32.totalorder %s40, 1
      %s42 = scalar_select %p41, 0, %s40
      %s43 = sadd.s32 1, %s34
      %s44 = scalar_select %p41, %s43, %s34
      %p45 = scmp.ge.s32.totalorder %s44, 2
      %s46 = scalar_select %p45, 0, %s44
      %s47 = ssub.s32 %s34, %s46
      %p48 = scmp.eq.s32.totalorder %s47, 0
      %s50 = sadd.s32 %s49, 1
      %s51 = scalar_select %p48, %s49, %s50
      %p54 = pneg %p48
      %p55 = scmp.eq.s32.totalorder %s27, 1
      %p56 = por %p54, %p55
      %p57 = scmp.ne.s32.totalorder %s49, %s52
      %p58 = scmp.eq.s32.totalorder %s27, 0
      %p59 = por %p57, %p58
      %p60 = scmp.ne.s32.totalorder %s49, %s52
      %p61 = scmp.eq.s32.totalorder %s32, 1
      %p62 = por %p60, %p61
      %p63 = scmp.ne.s32.totalorder %s52, %s53
      %p64 = scmp.eq.s32.totalorder %s32, 0
      %p65 = por %p63, %p64
      %p66 = scmp.ne.s32.totalorder %s52, %s53
      %p67 = scmp.eq.s32.totalorder %s33, 1
      %p68 = por %p66, %p67
      %p70 = scmp.ne.s32.totalorder %s53, %s69
      %p71 = scmp.eq.s32.totalorder %s33, 0
      %p72 = por %p70, %p71
      %s74 = sadd.s32 %s73, 1
      %p77 = scmp.eq.s32.totalorder %s27, 1
      %p78 = scmp.ne.s32.totalorder %s73, %s75
      %p79 = scmp.eq.s32.totalorder %s27, 0
      %p80 = por %p78, %p79
      %p81 = scmp.ne.s32.totalorder %s73, %s75
      %p82 = scmp.eq.s32.totalorder %s32, 1
      %p83 = por %p81, %p82
      %p84 = scmp.ne.s32.totalorder %s75, %s76
      %p85 = scmp.eq.s32.totalorder %s32, 0
      %p86 = por %p84, %p85
      %p87 = scmp.ne.s32.totalorder %s75, %s76
      %p88 = scmp.eq.s32.totalorder %s33, 1
      %p89 = por %p87, %p88
      %p91 = scmp.ne.s32.totalorder %s76, %s90
      %p92 = scmp.eq.s32.totalorder %s33, 0
      %p93 = por %p91, %p92
      %s95 = sadd.s32 %s94, 1
      %p98 = scmp.eq.s32.totalorder %s27, 1
      %p99 = scmp.ne.s32.totalorder %s94, %s96
      %p100 = scmp.eq.s32.totalorder %s27, 0
      %p101 = por %p99, %p100
      %p102 = scmp.ne.s32.totalorder %s94, %s96
      %p103 = scmp.eq.s32.totalorder %s32, 1
      %p104 = por %p102, %p103
      %p105 = scmp.ne.s32.totalorder %s96, %s97
      %p106 = scmp.eq.s32.totalorder %s32, 0
      %p107 = por %p105, %p106
      %p108 = scmp.ne.s32.totalorder %s96, %s97
      %p109 = scmp.eq.s32.totalorder %s33, 1
      %p110 = por %p108, %p109
      %p112 = scmp.ne.s32.totalorder %s97, %s111
      %p113 = scmp.eq.s32.totalorder %s33, 0
      %p114 = por %p112, %p113
      %s116 = sadd.s32 %s115, 1
      %p119 = scmp.eq.s32.totalorder %s27, 1
      %p120 = scmp.ne.s32.totalorder %s115, %s117
      %p121 = scmp.eq.s32.totalorder %s27, 0
      %p122 = por %p120, %p121
      %p123 = scmp.ne.s32.totalorder %s115, %s117
      %p124 = scmp.eq.s32.totalorder %s32, 1
      %p125 = por %p123, %p124
      %p126 = scmp.ne.s32.totalorder %s117, %s118
      %p127 = scmp.eq.s32.totalorder %s32, 0
      %p128 = por %p126, %p127
      %p129 = scmp.ne.s32.totalorder %s117, %s118
      %p130 = scmp.eq.s32.totalorder %s33, 1
      %p131 = por %p129, %p130
      %p133 = scmp.ne.s32.totalorder %s118, %s132
      %p134 = scmp.eq.s32.totalorder %s33, 0
      %p135 = por %p133, %p134
      %s137 = sadd.s32 %s136, 1
      %p140 = scmp.eq.s32.totalorder %s27, 1
      %p141 = scmp.ne.s32.totalorder %s136, %s138
      %p142 = scmp.eq.s32.totalorder %s27, 0
      %p143 = por %p141, %p142
      %p144 = scmp.ne.s32.totalorder %s136, %s138
      %p145 = scmp.eq.s32.totalorder %s32, 1
      %p146 = por %p144, %p145
      %p147 = scmp.ne.s32.totalorder %s138, %s139
      %p148 = scmp.eq.s32.totalorder %s32, 0
      %p149 = por %p147, %p148
      %p150 = scmp.ne.s32.totalorder %s138, %s139
      %p151 = scmp.eq.s32.totalorder %s33, 1
      %p152 = por %p150, %p151
      %p154 = scmp.ne.s32.totalorder %s139, %s153
      %p155 = scmp.eq.s32.totalorder %s33, 0
      %p156 = por %p154, %p155
      %s158 = sadd.s32 %s157, 1
      %p161 = scmp.eq.s32.totalorder %s27, 1
      %p162 = scmp.ne.s32.totalorder %s157, %s159
      %p163 = scmp.eq.s32.totalorder %s27, 0
      %p164 = por %p162, %p163
      %p165 = scmp.ne.s32.totalorder %s157, %s159
      %p166 = scmp.eq.s32.totalorder %s32, 1
      %p167 = por %p165, %p166
      %p168 = scmp.ne.s32.totalorder %s159, %s160
      %p169 = scmp.eq.s32.totalorder %s32, 0
      %p170 = por %p168, %p169
      %p171 = scmp.ne.s32.totalorder %s159, %s160
      %p172 = scmp.eq.s32.totalorder %s33, 1
      %p173 = por %p171, %p172
      %p175 = scmp.ne.s32.totalorder %s160, %s174
      %p176 = scmp.eq.s32.totalorder %s33, 0
      %p177 = por %p175, %p176
      %s179 = sadd.s32 %s178, 1
      %p182 = scmp.eq.s32.totalorder %s27, 1
      %p183 = scmp.ne.s32.totalorder %s178, %s180
      %p184 = scmp.eq.s32.totalorder %s27, 0
      %p185 = por %p183, %p184
      %p186 = scmp.ne.s32.totalorder %s178, %s180
      %p187 = scmp.eq.s32.totalorder %s32, 1
      %p188 = por %p186, %p187
      %p189 = scmp.ne.s32.totalorder %s180, %s181
      %p190 = scmp.eq.s32.totalorder %s32, 0
      %p191 = por %p189, %p190
      %p192 = scmp.ne.s32.totalorder %s180, %s181
      %p193 = scmp.eq.s32.totalorder %s33, 1
      %p194 = por %p192, %p193
      %p196 = scmp.ne.s32.totalorder %s181, %s195
      %p197 = scmp.eq.s32.totalorder %s33, 0
      %p198 = por %p196, %p197
      %s200 = sadd.s32 %s199, 1
      %p203 = scmp.eq.s32.totalorder %s27, 1
      %p204 = scmp.ne.s32.totalorder %s199, %s201
      %p205 = scmp.eq.s32.totalorder %s27, 0
      %p206 = por %p204, %p205
      %p207 = scmp.ne.s32.totalorder %s199, %s201
      %p208 = scmp.eq.s32.totalorder %s32, 1
      %p209 = por %p207, %p208
      %p210 = scmp.ne.s32.totalorder %s201, %s202
      %p211 = scmp.eq.s32.totalorder %s32, 0
      %p212 = por %p210, %p211
      %p213 = scmp.ne.s32.totalorder %s201, %s202
      %p214 = scmp.eq.s32.totalorder %s33, 1
      %p215 = por %p213, %p214
      %p217 = scmp.ne.s32.totalorder %s202, %s216
      %p218 = scmp.eq.s32.totalorder %s33, 0
      %p219 = por %p217, %p218
      %s221 = sadd.s32 %s220, 1
      %p224 = scmp.eq.s32.totalorder %s27, 1
      %p225 = scmp.ne.s32.totalorder %s220, %s222
      %p226 = scmp.eq.s32.totalorder %s27, 0
      %p227 = por %p225, %p226
      %p228 = scmp.ne.s32.totalorder %s220, %s222
      %p229 = scmp.eq.s32.totalorder %s32, 1
      %p230 = por %p228, %p229
      %p231 = scmp.ne.s32.totalorder %s222, %s223
      %p232 = scmp.eq.s32.totalorder %s32, 0
      %p233 = por %p231, %p232
      %p234 = scmp.ne.s32.totalorder %s222, %s223
      %p235 = scmp.eq.s32.totalorder %s33, 1
      %p236 = por %p234, %p235
      %p238 = scmp.ne.s32.totalorder %s223, %s237
      %p239 = scmp.eq.s32.totalorder %s33, 0
      %p240 = por %p238, %p239
      %s242 = sadd.s32 %s241, 1
      %p245 = scmp.eq.s32.totalorder %s27, 1
      %p246 = scmp.ne.s32.totalorder %s241, %s243
      %p247 = scmp.eq.s32.totalorder %s27, 0
      %p248 = por %p246, %p247
      %p249 = scmp.ne.s32.totalorder %s241, %s243
      %p250 = scmp.eq.s32.totalorder %s32, 1
      %p251 = por %p249, %p250
      %p252 = scmp.ne.s32.totalorder %s243, %s244
      %p253 = scmp.eq.s32.totalorder %s32, 0
      %p254 = por %p252, %p253
      %p255 = scmp.ne.s32.totalorder %s243, %s244
      %p256 = scmp.eq.s32.totalorder %s33, 1
      %p257 = por %p255, %p256
      %p259 = scmp.ne.s32.totalorder %s244, %s258
      %p260 = scmp.eq.s32.totalorder %s33, 0
      %p261 = por %p259, %p260
      %s263 = sadd.s32 %s262, 1
      %p266 = scmp.eq.s32.totalorder %s27, 1
      %p267 = scmp.ne.s32.totalorder %s262, %s264
      %p268 = scmp.eq.s32.totalorder %s27, 0
      %p269 = por %p267, %p268
      %p270 = scmp.ne.s32.totalorder %s262, %s264
      %p271 = scmp.eq.s32.totalorder %s32, 1
      %p272 = por %p270, %p271
      %p273 = scmp.ne.s32.totalorder %s264, %s265
      %p274 = scmp.eq.s32.totalorder %s32, 0
      %p275 = por %p273, %p274
      %p276 = scmp.ne.s32.totalorder %s264, %s265
      %p277 = scmp.eq.s32.totalorder %s33, 1
      %p278 = por %p276, %p277
      %p280 = scmp.ne.s32.totalorder %s265, %s279
      %p281 = scmp.eq.s32.totalorder %s33, 0
      %p282 = por %p280, %p281
      %s284 = sadd.s32 %s283, 1
      %p287 = scmp.eq.s32.totalorder %s27, 1
      %p288 = scmp.ne.s32.totalorder %s283, %s285
      %p289 = scmp.eq.s32.totalorder %s27, 0
      %p290 = por %p288, %p289
      %p291 = scmp.ne.s32.totalorder %s283, %s285
      %p292 = scmp.eq.s32.totalorder %s32, 1
      %p293 = por %p291, %p292
      %p294 = scmp.ne.s32.totalorder %s285, %s286
      %p295 = scmp.eq.s32.totalorder %s32, 0
      %p296 = por %p294, %p295
      %p297 = scmp.ne.s32.totalorder %s285, %s286
      %p298 = scmp.eq.s32.totalorder %s33, 1
      %p299 = por %p297, %p298
      %p301 = scmp.ne.s32.totalorder %s286, %s300
      %p302 = scmp.eq.s32.totalorder %s33, 0
      %p303 = por %p301, %p302
      %s305 = sadd.s32 %s304, 1
      %p308 = scmp.eq.s32.totalorder %s27, 1
      %p309 = scmp.ne.s32.totalorder %s304, %s306
      %p310 = scmp.eq.s32.totalorder %s27, 0
      %p311 = por %p309, %p310
      %p312 = scmp.ne.s32.totalorder %s304, %s306
      %p313 = scmp.eq.s32.totalorder %s32, 1
      %p314 = por %p312, %p313
      %p315 = scmp.ne.s32.totalorder %s306, %s307
      %p316 = scmp.eq.s32.totalorder %s32, 0
      %p317 = por %p315, %p316
      %p318 = scmp.ne.s32.totalorder %s306, %s307
      %p319 = scmp.eq.s32.totalorder %s33, 1
      %p320 = por %p318, %p319
      %p322 = scmp.ne.s32.totalorder %s307, %s321
      %p323 = scmp.eq.s32.totalorder %s33, 0
      %p324 = por %p322, %p323
      %s325 = ssub.s32 %s34, %s46
      %s326 = ssub.s32 %s35, %s42
      %s327 = sor.u32 %s325, %s326
      %p328 = scmp.eq.s32.totalorder %s327, 0
      %s330 = sadd.s32 %s329, 1
      %s331 = scalar_select %p328, %s329, %s330
      %p334 = pneg %p328
      %p335 = scmp.eq.s32.totalorder %s27, 1
      %p336 = por %p334, %p335
      %p337 = scmp.ne.s32.totalorder %s329, %s332
      %p338 = scmp.eq.s32.totalorder %s27, 0
      %p339 = por %p337, %p338
      %p340 = scmp.ne.s32.totalorder %s329, %s332
      %p341 = scmp.eq.s32.totalorder %s32, 1
      %p342 = por %p340, %p341
      %p343 = scmp.ne.s32.totalorder %s332, %s333
      %p344 = scmp.eq.s32.totalorder %s32, 0
      %p345 = por %p343, %p344
      %p346 = scmp.ne.s32.totalorder %s332, %s333
      %p347 = scmp.eq.s32.totalorder %s33, 1
      %p348 = por %p346, %p347
      %p350 = scmp.ne.s32.totalorder %s333, %s349
      %p351 = scmp.eq.s32.totalorder %s33, 0
      %p352 = por %p350, %p351
      %s353 = ssub.s32 %s34, %s46
      %s354 = ssub.s32 %s35, %s42
      %s355 = sor.u32 %s353, %s354
      %p356 = scmp.eq.s32.totalorder %s355, 0
      %s358 = sadd.s32 %s357, 1
      %s359 = scalar_select %p356, %s357, %s358
      %p362 = pneg %p356
      %p363 = scmp.eq.s32.totalorder %s27, 1
      %p364 = por %p362, %p363
      %p365 = scmp.ne.s32.totalorder %s357, %s360
      %p366 = scmp.eq.s32.totalorder %s27, 0
      %p367 = por %p365, %p366
      %p368 = scmp.ne.s32.totalorder %s357, %s360
      %p369 = scmp.eq.s32.totalorder %s32, 1
      %p370 = por %p368, %p369
      %p371 = scmp.ne.s32.totalorder %s360, %s361
      %p372 = scmp.eq.s32.totalorder %s32, 0
      %p373 = por %p371, %p372
      %p374 = scmp.ne.s32.totalorder %s360, %s361
      %p375 = scmp.eq.s32.totalorder %s33, 1
      %p376 = por %p374, %p375
      %p378 = scmp.ne.s32.totalorder %s361, %s377
      %p379 = scmp.eq.s32.totalorder %s33, 0
      %p380 = por %p378, %p379
      %p381 = scmp.le.s32.totalorder 1, %s27
      %p382 = scmp.lt.s32.totalorder %s27, 3
      %p383 = pnand %p381, %p382
      %p384 = pneg %p383
      // Predicated region
      $region9: #{vc_encoder_layer.1} parent=5 // pred_check
        _
      $region10: #{vc_encoder_layer.1} parent=5 // pred_check_branch
        %386 = sbr.rel (%p383) target = $region12
      $region11: #{vc_encoder_layer.1} parent=5 // pred_region
        %s387 = ssub.s32 %s27, 1
        // Predicated region
        $region13: #{vc_encoder_layer.1} parent=11 // pred_check
          %p388 = pneg %p86
        $region14: #{vc_encoder_layer.1} parent=11 // pred_check_branch
          %390 = sbr.rel (%p388) target = $region16
        $region15: #{vc_encoder_layer.1} parent=11 // pred_region
          _
        $region16: #{vc_encoder_layer.1} parent=11 // pred_fallthru
          _
        // Predicated region
        $region17: #{vc_encoder_layer.1} parent=11 // pred_check
          %p391 = pneg %p107
        $region18: #{vc_encoder_layer.1} parent=11 // pred_check_branch
          %393 = sbr.rel (%p391) target = $region20
        $region19: #{vc_encoder_layer.1} parent=11 // pred_region
          _
        $region20: #{vc_encoder_layer.1} parent=11 // pred_fallthru
          _
        // Predicated region
        $region21: #{vc_encoder_layer.1} parent=11 // pred_check
          %p394 = pneg %p128
        $region22: #{vc_encoder_layer.1} parent=11 // pred_check_branch
          %396 = sbr.rel (%p394) target = $region24
        $region23: #{vc_encoder_layer.1} parent=11 // pred_region
          _
        $region24: #{vc_encoder_layer.1} parent=11 // pred_fallthru
          _
        // Predicated region
        $region25: #{vc_encoder_layer.1} parent=11 // pred_check
          %p397 = pneg %p149
        $region26: #{vc_encoder_layer.1} parent=11 // pred_check_branch
          %399 = sbr.rel (%p397) target = $region28
        $region27: #{vc_encoder_layer.1} parent=11 // pred_region
          _
        $region28: #{vc_encoder_layer.1} parent=11 // pred_fallthru
          _
        // Predicated region
        $region29: #{vc_encoder_layer.1} parent=11 // pred_check
          %p400 = pneg %p170
        $region30: #{vc_encoder_layer.1} parent=11 // pred_check_branch
          %402 = sbr.rel (%p400) target = $region32
        $region31: #{vc_encoder_layer.1} parent=11 // pred_region
          _
        $region32: #{vc_encoder_layer.1} parent=11 // pred_fallthru
          _
        // Predicated region
        $region33: #{vc_encoder_layer.1} parent=11 // pred_check
          %p403 = pneg %p191
        $region34: #{vc_encoder_layer.1} parent=11 // pred_check_branch
          %405 = sbr.rel (%p403) target = $region36
        $region35: #{vc_encoder_layer.1} parent=11 // pred_region
          _
        $region36: #{vc_encoder_layer.1} parent=11 // pred_fallthru
          _
        // Predicated region
        $region37: #{vc_encoder_layer.1} parent=11 // pred_check
          %p406 = pneg %p212
        $region38: #{vc_encoder_layer.1} parent=11 // pred_check_branch
          %408 = sbr.rel (%p406) target = $region40
        $region39: #{vc_encoder_layer.1} parent=11 // pred_region
          _
        $region40: #{vc_encoder_layer.1} parent=11 // pred_fallthru
          _
        // Predicated region
        $region41: #{vc_encoder_layer.1} parent=11 // pred_check
          %p409 = pneg %p233
        $region42: #{vc_encoder_layer.1} parent=11 // pred_check_branch
          %411 = sbr.rel (%p409) target = $region44
        $region43: #{vc_encoder_layer.1} parent=11 // pred_region
          _
        $region44: #{vc_encoder_layer.1} parent=11 // pred_fallthru
          _
        // Predicated region
        $region45: #{vc_encoder_layer.1} parent=11 // pred_check
          %p412 = pneg %p254
        $region46: #{vc_encoder_layer.1} parent=11 // pred_check_branch
          %414 = sbr.rel (%p412) target = $region48
        $region47: #{vc_encoder_layer.1} parent=11 // pred_region
          _
        $region48: #{vc_encoder_layer.1} parent=11 // pred_fallthru
          _
        // Predicated region
        $region49: #{vc_encoder_layer.1} parent=11 // pred_check
          %p415 = pneg %p275
        $region50: #{vc_encoder_layer.1} parent=11 // pred_check_branch
          %417 = sbr.rel (%p415) target = $region52
        $region51: #{vc_encoder_layer.1} parent=11 // pred_region
          _
        $region52: #{vc_encoder_layer.1} parent=11 // pred_fallthru
          _
        // Predicated region
        $region53: #{vc_encoder_layer.1} parent=11 // pred_check
          %p418 = pneg %p296
        $region54: #{vc_encoder_layer.1} parent=11 // pred_check_branch
          %420 = sbr.rel (%p418) target = $region56
        $region55: #{vc_encoder_layer.1} parent=11 // pred_region
          _
        $region56: #{vc_encoder_layer.1} parent=11 // pred_fallthru
          _
        // Predicated region
        $region57: #{vc_encoder_layer.1} parent=11 // pred_check
          %p421 = pneg %p317
        $region58: #{vc_encoder_layer.1} parent=11 // pred_check_branch
          %423 = sbr.rel (%p421) target = $region60
        $region59: #{vc_encoder_layer.1} parent=11 // pred_region
          _
        $region60: #{vc_encoder_layer.1} parent=11 // pred_fallthru
          _
      $region12: #{vc_encoder_layer.1} parent=5 // pred_fallthru
        _
      %p424 = scmp.lt.s32.totalorder %s27, 2
      // Predicated region
      $region61: #{vc_encoder_layer.1} parent=5 // pred_check
        %p425 = pneg %p424
      $region62: #{vc_encoder_layer.1} parent=5 // pred_check_branch
        %427 = sbr.rel (%p425) target = $region64
      $region63: #{vc_encoder_layer.1} parent=5 // pred_region
        // Predicated region
        $region65: #{vc_encoder_layer.1} parent=63 // pred_check
          %p428 = pneg %p59
        $region66: #{vc_encoder_layer.1} parent=63 // pred_check_branch
          %430 = sbr.rel (%p428) target = $region68
        $region67: #{vc_encoder_layer.1} parent=63 // pred_region
          %p431 = scmp.lt.s32.totalorder %s34, 1
          %s432 = scalar_select %p431, %s34, 1
          %s433 = smul.addr %s432, 16
          %s434 = smul.addr %s433, 8
          %s435 = scalar_lea.vmem %s0, %s434
        $region68: #{vc_encoder_layer.1} parent=63 // pred_fallthru
          _
      $region64: #{vc_encoder_layer.1} parent=5 // pred_fallthru
        _
      %p436 = scmp.le.s32.totalorder 1, %s27
      %p437 = scmp.lt.s32.totalorder %s27, 3
      %p438 = pnand %p436, %p437
      %p439 = pneg %p438
      // Predicated region
      $region69: #{vc_encoder_layer.1} parent=5 // pred_check
        _
      $region70: #{vc_encoder_layer.1} parent=5 // pred_check_branch
        %441 = sbr.rel (%p438) target = $region72
      $region71: #{vc_encoder_layer.1} parent=5 // pred_region
        %s442 = ssub.s32 %s27, 1
        %p443 = scmp.lt.s32.totalorder %s36, 1
        %s444 = scalar_select %p443, %s36, 1
        %s445 = smul.addr %s444, 16
        %s446 = smul.addr %s445, 8
        %s447 = scalar_lea.vmem %s0, %s446
        %p448 = pneg %p65
        %p449 = pneg %p62
        %p450 = pneg %p86
        %p451 = pneg %p83
        %p452 = pneg %p107
        %p453 = pneg %p104
        %p454 = pneg %p128
        %p455 = pneg %p125
        %p456 = pneg %p149
        %p457 = pneg %p146
        %p458 = pneg %p170
        %p459 = pneg %p167
        %p460 = pneg %p191
        %p461 = pneg %p188
        %p462 = pneg %p212
        %p463 = pneg %p209
        %p464 = pneg %p233
        %p465 = pneg %p230
        %p466 = pneg %p254
        %p467 = pneg %p251
        %p468 = pneg %p275
        %p469 = pneg %p272
        %p470 = pneg %p296
        %p471 = pneg %p293
        %p472 = pneg %p317
        %p473 = pneg %p314
        %p474 = pneg %p345
        %p475 = pneg %p342
        %s476 = sand.u32 %s332, 1
        %s477 = scalar_lea.sflag [#allocation4], %s476
        %s478 = sand.u32 %s332, 1
        %s479 = smul.addr %s478, 128
        %s480 = scalar_lea.vmem [#allocation3], %s479
        %p481 = pneg %p373
        %p482 = pneg %p370
        %s483 = sand.u32 %s360, 1
        %s484 = scalar_lea.sflag [#allocation6], %s483
        %s485 = sand.u32 %s360, 1
        %s486 = smul.addr %s485, 64
        %s487 = scalar_lea.vmem [#allocation5], %s486
        %p488 = scmp.lt.s32.totalorder %s36, 1
        %s489 = scalar_select %p488, %s36, 1
        %s490 = smul.addr %s489, 16
        %s491 = smul.addr %s490, 8
        %s492 = scalar_lea.vmem %s0, %s491
        %s493 = smul.u32 16, %s37
        %s494 = smul.u32 16, %s37
        %p495 = scmp.eq.s32.totalorder %s37, 0
        // Predicated region
        $region73: #{vc_encoder_layer.1} parent=71 // pred_check
          %p496 = pneg %p495
        $region74: #{vc_encoder_layer.1} parent=71 // pred_check_branch
          %498 = sbr.rel (%p496) target = $region76
        $region75: #{vc_encoder_layer.1} parent=71 // pred_region
          %v499 = vld [vmem:[%s492] sm:$0xff]
          %v500 = vld [vmem:[%s492 + $0x8] sm:$0xff]
          %v501 = vld [vmem:[%s492 + $0x10] sm:$0xff]
          %v502 = vld [vmem:[%s492 + $0x18] sm:$0xff]
          %v503 = vld [vmem:[%s492 + $0x20] sm:$0xff]
          %v504 = vld [vmem:[%s492 + $0x28] sm:$0xff]
          %v505 = vld [vmem:[%s492 + $0x30] sm:$0xff]
          %v506 = vld [vmem:[%s492 + $0x38] sm:$0xff]
          %v507 = vld [vmem:[%s492 + $0x40] sm:$0xff]
          %v508 = vld [vmem:[%s492 + $0x48] sm:$0xff]
          %v509 = vld [vmem:[%s492 + $0x50] sm:$0xff]
          %v510 = vld [vmem:[%s492 + $0x58] sm:$0xff]
          %v511 = vld [vmem:[%s492 + $0x60] sm:$0xff]
          %v512 = vld [vmem:[%s492 + $0x68] sm:$0xff]
          %v513 = vld [vmem:[%s492 + $0x70] sm:$0xff]
          %v514 = vld [vmem:[%s492 + $0x78] sm:$0xff]
          %v515 = vpack.c.bf16 %v500, %v499
          %v516 = vpack.c.bf16 %v502, %v501
          %v517 = vpack.c.bf16 %v504, %v503
          %v518 = vpack.c.bf16 %v506, %v505
          %v519 = vpack.c.bf16 %v508, %v507
          %v520 = vpack.c.bf16 %v510, %v509
          %v521 = vpack.c.bf16 %v512, %v511
          %v522 = vpack.c.bf16 %v514, %v513
          %v523 = vld [vmem:[%s1] sm:$0xff]
          %v524 = vld [vmem:[%s1 + $0x8] sm:$0xf]
          %v525 = vld [vmem:[%s1 + $0xc] sm:$0xff]
          %v526 = vld [vmem:[%s1 + $0x14] sm:$0xf]
          %v527 = vld [vmem:[%s1 + $0x18] sm:$0xff]
          %v528 = vld [vmem:[%s1 + $0x20] sm:$0xf]
          %v529 = vld [vmem:[%s1 + $0x24] sm:$0xff]
          %v530 = vld [vmem:[%s1 + $0x2c] sm:$0xf]
          %v531 = vld [vmem:[%s1 + $0x30] sm:$0xff]
          %v532 = vld [vmem:[%s1 + $0x38] sm:$0xf]
          %v533 = vld [vmem:[%s1 + $0x3c] sm:$0xff]
          %v534 = vld [vmem:[%s1 + $0x44] sm:$0xf]
          %v535 = vld [vmem:[%s1 + $0x48] sm:$0xff]
          %v536 = vld [vmem:[%s1 + $0x50] sm:$0xf]
          %v537 = vld [vmem:[%s1 + $0x54] sm:$0xff]
          %v538 = vld [vmem:[%s1 + $0x5c] sm:$0xf]
          %v539 = vld [vmem:[%s1 + $0x60] sm:$0xff]
          %v540 = vld [vmem:[%s1 + $0x68] sm:$0xf]
          %v541 = vld [vmem:[%s1 + $0x6c] sm:$0xff]
          %v542 = vld [vmem:[%s1 + $0x74] sm:$0xf]
          %v543 = vld [vmem:[%s1 + $0x78] sm:$0xff]
          %v544 = vld [vmem:[%s1 + $0x80] sm:$0xf]
          %v545 = vld [vmem:[%s1 + $0x84] sm:$0xff]
          %v546 = vld [vmem:[%s1 + $0x8c] sm:$0xf]
          %v547 = vld [vmem:[%s1 + $0x90] sm:$0xff]
          %v548 = vld [vmem:[%s1 + $0x98] sm:$0xf]
          %v549 = vld [vmem:[%s1 + $0x9c] sm:$0xff]
          %v550 = vld [vmem:[%s1 + $0xa4] sm:$0xf]
          %v551 = vld [vmem:[%s1 + $0xa8] sm:$0xff]
          %v552 = vld [vmem:[%s1 + $0xb0] sm:$0xf]
          %v553 = vld [vmem:[%s1 + $0xb4] sm:$0xff]
          %v554 = vld [vmem:[%s1 + $0xbc] sm:$0xf]
          %v555 = vld [vmem:[%s2] sm:$0x7]
          %v557 = vperm.slane %v555, 0
          %v558 = vperm.slane %v555, 1
          %v559 = vperm.slane %v555, 2
          %v595 = vunpack.c.l.b16 %v523
          %v596 = vunpack.c.h.b16 %v523
          %v597 = vunpack.c.l.b16 %v524
          %v598 = vunpack.c.l.b16 %v525
          %v599 = vunpack.c.h.b16 %v525
          %v600 = vunpack.c.l.b16 %v526
          %v601 = vunpack.c.l.b16 %v527
          %v602 = vunpack.c.h.b16 %v527
          %v603 = vunpack.c.l.b16 %v528
          %v604 = vunpack.c.l.b16 %v529
          %v605 = vunpack.c.h.b16 %v529
          %v606 = vunpack.c.l.b16 %v530
          %v607 = vunpack.c.l.b16 %v531
          %v608 = vunpack.c.h.b16 %v531
          %v609 = vunpack.c.l.b16 %v532
          %v610 = vunpack.c.l.b16 %v533
          %v611 = vunpack.c.h.b16 %v533
          %v612 = vunpack.c.l.b16 %v534
          %v613 = vunpack.c.l.b16 %v535
          %v614 = vunpack.c.h.b16 %v535
          %v615 = vunpack.c.l.b16 %v536
          %v616 = vunpack.c.l.b16 %v537
          %v617 = vunpack.c.h.b16 %v537
          %v618 = vunpack.c.l.b16 %v538
          %v619 = vunpack.c.l.b16 %v539
          %v620 = vunpack.c.h.b16 %v539
          %v621 = vunpack.c.l.b16 %v540
          %v622 = vunpack.c.l.b16 %v541
          %v623 = vunpack.c.h.b16 %v541
          %v624 = vunpack.c.l.b16 %v542
          %v625 = vunpack.c.l.b16 %v543
          %v626 = vunpack.c.h.b16 %v543
          %v627 = vunpack.c.l.b16 %v544
          %v628 = vunpack.c.l.b16 %v545
          %v629 = vunpack.c.h.b16 %v545
          %v630 = vunpack.c.l.b16 %v546
          %v631 = vunpack.c.l.b16 %v547
          %v632 = vunpack.c.h.b16 %v547
          %v633 = vunpack.c.l.b16 %v548
          %v634 = vunpack.c.l.b16 %v549
          %v635 = vunpack.c.h.b16 %v549
          %v636 = vunpack.c.l.b16 %v550
          %v637 = vunpack.c.l.b16 %v551
          %v638 = vunpack.c.h.b16 %v551
          %v639 = vunpack.c.l.b16 %v552
          %v640 = vunpack.c.l.b16 %v553
          %v641 = vunpack.c.h.b16 %v553
          %v642 = vunpack.c.l.b16 %v554
          %v643 = vpack.c.b16 %v598, %v595
          %v644 = vpack.c.b16 %v599, %v596
          %v645 = vpack.c.b16 %v600, %v597
          %v646 = vpack.c.b16 %v604, %v601
          %v647 = vpack.c.b16 %v605, %v602
          %v648 = vpack.c.b16 %v606, %v603
          %v649 = vpack.c.b16 %v610, %v607
          %v650 = vpack.c.b16 %v611, %v608
          %v651 = vpack.c.b16 %v612, %v609
          %v652 = vpack.c.b16 %v616, %v613
          %v653 = vpack.c.b16 %v617, %v614
          %v654 = vpack.c.b16 %v618, %v615
          %v655 = vpack.c.b16 %v622, %v619
          %v656 = vpack.c.b16 %v623, %v620
          %v657 = vpack.c.b16 %v624, %v621
          %v658 = vpack.c.b16 %v628, %v625
          %v659 = vpack.c.b16 %v629, %v626
          %v660 = vpack.c.b16 %v630, %v627
          %v661 = vpack.c.b16 %v634, %v631
          %v662 = vpack.c.b16 %v635, %v632
          %v663 = vpack.c.b16 %v636, %v633
          %v664 = vpack.c.b16 %v640, %v637
          %v665 = vpack.c.b16 %v641, %v638
          %v666 = vpack.c.b16 %v642, %v639
          %691 = vmatpush.bf16.msra.mxu0 %v664
          %692 = vmatpush.bf16.msra.mxu0 %v661
          %693 = vmatpush.bf16.msra.mxu0 %v658
          %694 = vmatpush.bf16.msra.mxu0 %v655
          %695 = vmatpush.bf16.msra.mxu0 %v652
          %696 = vmatpush.bf16.msra.mxu0 %v649
          %697 = vmatpush.bf16.msra.mxu0 %v646
          %698 = vmatpush.bf16.msra.mxu0 %v643
          %699 = vmatmul.bf16.gmra.mxu0 %v515
          %v700 = vpop.f32.mrf.mxu0
          %v701 = vadd.f32 %v557, %v700
          %v702 = vpop.f32.mrf.mxu0
          %v703 = vadd.f32 %v557, %v702
          %704 = vmatmul.bf16.gmra.mxu0 %v516
          %v705 = vpop.f32.mrf.mxu0
          %v706 = vadd.f32 %v557, %v705
          %v707 = vpop.f32.mrf.mxu0
          %v708 = vadd.f32 %v557, %v707
          %709 = vmatmul.bf16.gmra.mxu0 %v517
          %v710 = vpop.f32.mrf.mxu0
          %v711 = vadd.f32 %v557, %v710
          %v712 = vpop.f32.mrf.mxu0
          %v713 = vadd.f32 %v557, %v712
          %714 = vmatmul.bf16.gmra.mxu0 %v518
          %v715 = vpop.f32.mrf.mxu0
          %v716 = vadd.f32 %v557, %v715
          %v717 = vpop.f32.mrf.mxu0
          %v718 = vadd.f32 %v557, %v717
          %719 = vmatmul.bf16.gmra.mxu0 %v519
          %v720 = vpop.f32.mrf.mxu0
          %v721 = vadd.f32 %v557, %v720
          %v722 = vpop.f32.mrf.mxu0
          %v723 = vadd.f32 %v557, %v722
          %724 = vmatmul.bf16.gmra.mxu0 %v520
          %v725 = vpop.f32.mrf.mxu0
          %v726 = vadd.f32 %v557, %v725
          %v727 = vpop.f32.mrf.mxu0
          %v728 = vadd.f32 %v557, %v727
          %729 = vmatmul.bf16.gmra.mxu0 %v521
          %v730 = vpop.f32.mrf.mxu0
          %v731 = vadd.f32 %v557, %v730
          %v732 = vpop.f32.mrf.mxu0
          %v733 = vadd.f32 %v557, %v732
          %734 = vmatmul.bf16.gmra.mxu0 %v522
          %v735 = vpop.f32.mrf.mxu0
          %v736 = vadd.f32 %v557, %v735
          %v737 = vpop.f32.mrf.mxu0
          %v738 = vadd.f32 %v557, %v737
          %739 = vdwg.mxu0
          %740 = vmatpush.bf16.msra.mxu0 %v665
          %741 = vmatpush.bf16.msra.mxu0 %v662
          %742 = vmatpush.bf16.msra.mxu0 %v659
          %743 = vmatpush.bf16.msra.mxu0 %v656
          %744 = vmatpush.bf16.msra.mxu0 %v653
          %745 = vmatpush.bf16.msra.mxu0 %v650
          %746 = vmatpush.bf16.msra.mxu0 %v647
          %747 = vmatpush.bf16.msra.mxu0 %v644
          %748 = vmatmul.bf16.gmra.mxu0 %v515
          %v749 = vpop.f32.mrf.mxu0
          %v750 = vadd.f32 %v558, %v749
          %v751 = vpop.f32.mrf.mxu0
          %v752 = vadd.f32 %v558, %v751
          %753 = vmatmul.bf16.gmra.mxu0 %v516
          %v754 = vpop.f32.mrf.mxu0
          %v755 = vadd.f32 %v558, %v754
          %v756 = vpop.f32.mrf.mxu0
          %v757 = vadd.f32 %v558, %v756
          %758 = vmatmul.bf16.gmra.mxu0 %v517
          %v759 = vpop.f32.mrf.mxu0
          %v760 = vadd.f32 %v558, %v759
          %v761 = vpop.f32.mrf.mxu0
          %v762 = vadd.f32 %v558, %v761
          %763 = vmatmul.bf16.gmra.mxu0 %v518
          %v764 = vpop.f32.mrf.mxu0
          %v765 = vadd.f32 %v558, %v764
          %v766 = vpop.f32.mrf.mxu0
          %v767 = vadd.f32 %v558, %v766
          %768 = vmatmul.bf16.gmra.mxu0 %v519
          %v769 = vpop.f32.mrf.mxu0
          %v770 = vadd.f32 %v558, %v769
          %v771 = vpop.f32.mrf.mxu0
          %v772 = vadd.f32 %v558, %v771
          %773 = vmatmul.bf16.gmra.mxu0 %v520
          %v774 = vpop.f32.mrf.mxu0
          %v775 = vadd.f32 %v558, %v774
          %v776 = vpop.f32.mrf.mxu0
          %v777 = vadd.f32 %v558, %v776
          %778 = vmatmul.bf16.gmra.mxu0 %v521
          %v779 = vpop.f32.mrf.mxu0
          %v780 = vadd.f32 %v558, %v779
          %v781 = vpop.f32.mrf.mxu0
          %v782 = vadd.f32 %v558, %v781
          %783 = vmatmul.bf16.gmra.mxu0 %v522
          %v784 = vpop.f32.mrf.mxu0
          %v785 = vadd.f32 %v558, %v784
          %v786 = vpop.f32.mrf.mxu0
          %v787 = vadd.f32 %v558, %v786
          %788 = vdwg.mxu0
          %789 = vmatpush.bf16.msra.mxu0 %v666
          %790 = vmatpush.bf16.msra.mxu0 %v663
          %791 = vmatpush.bf16.msra.mxu0 %v660
          %792 = vmatpush.bf16.msra.mxu0 %v657
          %793 = vmatpush.bf16.msra.mxu0 %v654
          %794 = vmatpush.bf16.msra.mxu0 %v651
          %795 = vmatpush.bf16.msra.mxu0 %v648
          %796 = vmatpush.bf16.msra.mxu0 %v645
          %797 = vmatmul.bf16.gmra.mxu0 %v515
          %v798 = vpop.f32.mrf.mxu0
          %v799 = vadd.f32 %v559, %v798
          %v800 = vpop.f32.mrf.mxu0
          %v801 = vadd.f32 %v559, %v800
          %802 = vmatmul.bf16.gmra.mxu0 %v516
          %v803 = vpop.f32.mrf.mxu0
          %v804 = vadd.f32 %v559, %v803
          %v805 = vpop.f32.mrf.mxu0
          %v806 = vadd.f32 %v559, %v805
          %807 = vmatmul.bf16.gmra.mxu0 %v517
          %v808 = vpop.f32.mrf.mxu0
          %v809 = vadd.f32 %v559, %v808
          %v810 = vpop.f32.mrf.mxu0
          %v811 = vadd.f32 %v559, %v810
          %812 = vmatmul.bf16.gmra.mxu0 %v518
          %v813 = vpop.f32.mrf.mxu0
          %v814 = vadd.f32 %v559, %v813
          %v815 = vpop.f32.mrf.mxu0
          %v816 = vadd.f32 %v559, %v815
          %817 = vmatmul.bf16.gmra.mxu0 %v519
          %v818 = vpop.f32.mrf.mxu0
          %v819 = vadd.f32 %v559, %v818
          %v820 = vpop.f32.mrf.mxu0
          %v821 = vadd.f32 %v559, %v820
          %822 = vmatmul.bf16.gmra.mxu0 %v520
          %v823 = vpop.f32.mrf.mxu0
          %v824 = vadd.f32 %v559, %v823
          %v825 = vpop.f32.mrf.mxu0
          %v826 = vadd.f32 %v559, %v825
          %827 = vmatmul.bf16.gmra.mxu0 %v521
          %v828 = vpop.f32.mrf.mxu0
          %v829 = vadd.f32 %v559, %v828
          %v830 = vpop.f32.mrf.mxu0
          %v831 = vadd.f32 %v559, %v830
          %832 = vmatmul.bf16.gmra.mxu0 %v522
          %v833 = vpop.f32.mrf.mxu0
          %v834 = vadd.f32 %v559, %v833
          %v835 = vpop.f32.mrf.mxu0
          %v836 = vadd.f32 %v559, %v835
          %837 = vdwg.mxu0
          %v838 = vpack.c.bf16 %v750, %v701
          %v839 = vpack.c.bf16 %v799, %v799
          %v840 = vpack.c.bf16 %v752, %v703
          %v841 = vpack.c.bf16 %v801, %v801
          %v842 = vpack.c.bf16 %v755, %v706
          %v843 = vpack.c.bf16 %v804, %v804
          %v844 = vpack.c.bf16 %v757, %v708
          %v845 = vpack.c.bf16 %v806, %v806
          %v846 = vpack.c.bf16 %v760, %v711
          %v847 = vpack.c.bf16 %v809, %v809
          %v848 = vpack.c.bf16 %v762, %v713
          %v849 = vpack.c.bf16 %v811, %v811
          %v850 = vpack.c.bf16 %v765, %v716
          %v851 = vpack.c.bf16 %v814, %v814
          %v852 = vpack.c.bf16 %v767, %v718
          %v853 = vpack.c.bf16 %v816, %v816
          %v854 = vpack.c.bf16 %v770, %v721
          %v855 = vpack.c.bf16 %v819, %v819
          %v856 = vpack.c.bf16 %v772, %v723
          %v857 = vpack.c.bf16 %v821, %v821
          %v858 = vpack.c.bf16 %v775, %v726
          %v859 = vpack.c.bf16 %v824, %v824
          %v860 = vpack.c.bf16 %v777, %v728
          %v861 = vpack.c.bf16 %v826, %v826
          %v862 = vpack.c.bf16 %v780, %v731
          %v863 = vpack.c.bf16 %v829, %v829
          %v864 = vpack.c.bf16 %v782, %v733
          %v865 = vpack.c.bf16 %v831, %v831
          %v866 = vpack.c.bf16 %v785, %v736
          %v867 = vpack.c.bf16 %v834, %v834
          %v868 = vpack.c.bf16 %v787, %v738
          %v869 = vpack.c.bf16 %v836, %v836
          %870 = vst [vmem:[#allocation2] sm:$0xff] %v838
          %871 = vst [vmem:[#allocation2 + $0x8] sm:$0xf] %v839
          %872 = vst [vmem:[#allocation2 + $0xc] sm:$0xff] %v840
          %873 = vst [vmem:[#allocation2 + $0x14] sm:$0xf] %v841
          %874 = vst [vmem:[#allocation2 + $0x18] sm:$0xff] %v842
          %875 = vst [vmem:[#allocation2 + $0x20] sm:$0xf] %v843
          %876 = vst [vmem:[#allocation2 + $0x24] sm:$0xff] %v844
          %877 = vst [vmem:[#allocation2 + $0x2c] sm:$0xf] %v845
          %878 = vst [vmem:[#allocation2 + $0x30] sm:$0xff] %v846
          %879 = vst [vmem:[#allocation2 + $0x38] sm:$0xf] %v847
          %880 = vst [vmem:[#allocation2 + $0x3c] sm:$0xff] %v848
          %881 = vst [vmem:[#allocation2 + $0x44] sm:$0xf] %v849
          %882 = vst [vmem:[#allocation2 + $0x48] sm:$0xff] %v850
          %883 = vst [vmem:[#allocation2 + $0x50] sm:$0xf] %v851
          %884 = vst [vmem:[#allocation2 + $0x54] sm:$0xff] %v852
          %885 = vst [vmem:[#allocation2 + $0x5c] sm:$0xf] %v853
          %886 = vst [vmem:[#allocation2 + $0x60] sm:$0xff] %v854
          %887 = vst [vmem:[#allocation2 + $0x68] sm:$0xf] %v855
          %888 = vst [vmem:[#allocation2 + $0x6c] sm:$0xff] %v856
          %889 = vst [vmem:[#allocation2 + $0x74] sm:$0xf] %v857
          %890 = vst [vmem:[#allocation2 + $0x78] sm:$0xff] %v858
          %891 = vst [vmem:[#allocation2 + $0x80] sm:$0xf] %v859
          %892 = vst [vmem:[#allocation2 + $0x84] sm:$0xff] %v860
          %893 = vst [vmem:[#allocation2 + $0x8c] sm:$0xf] %v861
          %894 = vst [vmem:[#allocation2 + $0x90] sm:$0xff] %v862
          %895 = vst [vmem:[#allocation2 + $0x98] sm:$0xf] %v863
          %896 = vst [vmem:[#allocation2 + $0x9c] sm:$0xff] %v864
          %897 = vst [vmem:[#allocation2 + $0xa4] sm:$0xf] %v865
          %898 = vst [vmem:[#allocation2 + $0xa8] sm:$0xff] %v866
          %899 = vst [vmem:[#allocation2 + $0xb0] sm:$0xf] %v867
          %900 = vst [vmem:[#allocation2 + $0xb4] sm:$0xff] %v868
          %901 = vst [vmem:[#allocation2 + $0xbc] sm:$0xf] %v869
        $region76: #{vc_encoder_layer.1} parent=71 // pred_fallthru
          _
        %s902 = smul.u32 %s37, 128
        %s903 = sshra.s32 %s902, 3
        %s904 = sand.u32 %s902, 7
        %s905 = smul.u32 %s903, 3
        %s906 = smul.addr %s905, 4
        %s907 = scalar_lea.vmem [#allocation2], %s906
        %v908 = vld [vmem:[%s907] sm:$0xf]
        %v909 = vld [vmem:[%s907 + $0xc] sm:$0xf]
        %v910 = vld [vmem:[%s907 + $0x18] sm:$0xf]
        %v911 = vld [vmem:[%s907 + $0x24] sm:$0xf]
        %v912 = vld [vmem:[%s907 + $0x30] sm:$0xf]
        %v913 = vld [vmem:[%s907 + $0x3c] sm:$0xf]
        %v914 = vld [vmem:[%s907 + $0x48] sm:$0xf]
        %v915 = vld [vmem:[%s907 + $0x54] sm:$0xf]
        %v916 = vld [vmem:[%s907 + $0x60] sm:$0xf]
        %v917 = vld [vmem:[%s907 + $0x6c] sm:$0xf]
        %v918 = vld [vmem:[%s907 + $0x78] sm:$0xf]
        %v919 = vld [vmem:[%s907 + $0x84] sm:$0xf]
        %v920 = vld [vmem:[%s907 + $0x90] sm:$0xf]
        %v921 = vld [vmem:[%s907 + $0x9c] sm:$0xf]
        %v922 = vld [vmem:[%s907 + $0xa8] sm:$0xf]
        %v923 = vld [vmem:[%s907 + $0xb4] sm:$0xf]
        %v924 = vld [vmem:[#allocation2 + $0x4] sm:$0xf]
        %v925 = vld [vmem:[#allocation2 + $0x10] sm:$0xf]
        %v926 = vld [vmem:[#allocation2 + $0x1c] sm:$0xf]
        %v927 = vld [vmem:[#allocation2 + $0x28] sm:$0xf]
        %v928 = vld [vmem:[#allocation2 + $0x34] sm:$0xf]
        %v929 = vld [vmem:[#allocation2 + $0x40] sm:$0xf]
        %v930 = vld [vmem:[#allocation2 + $0x4c] sm:$0xf]
        %v931 = vld [vmem:[#allocation2 + $0x58] sm:$0xf]
        %v932 = vld [vmem:[#allocation2 + $0x64] sm:$0xf]
        %v933 = vld [vmem:[#allocation2 + $0x70] sm:$0xf]
        %v934 = vld [vmem:[#allocation2 + $0x7c] sm:$0xf]
        %v935 = vld [vmem:[#allocation2 + $0x88] sm:$0xf]
        %v936 = vld [vmem:[#allocation2 + $0x94] sm:$0xf]
        %v937 = vld [vmem:[#allocation2 + $0xa0] sm:$0xf]
        %v938 = vld [vmem:[#allocation2 + $0xac] sm:$0xf]
        %v939 = vld [vmem:[#allocation2 + $0xb8] sm:$0xf]
        %v940 = vld [vmem:[#allocation2 + $0x8] sm:$0xf]
        %v941 = vld [vmem:[#allocation2 + $0x14] sm:$0xf]
        %v942 = vld [vmem:[#allocation2 + $0x20] sm:$0xf]
        %v943 = vld [vmem:[#allocation2 + $0x2c] sm:$0xf]
        %v944 = vld [vmem:[#allocation2 + $0x38] sm:$0xf]
        %v945 = vld [vmem:[#allocation2 + $0x44] sm:$0xf]
        %v946 = vld [vmem:[#allocation2 + $0x50] sm:$0xf]
        %v947 = vld [vmem:[#allocation2 + $0x5c] sm:$0xf]
        %v948 = vld [vmem:[#allocation2 + $0x68] sm:$0xf]
        %v949 = vld [vmem:[#allocation2 + $0x74] sm:$0xf]
        %v950 = vld [vmem:[#allocation2 + $0x80] sm:$0xf]
        %v951 = vld [vmem:[#allocation2 + $0x8c] sm:$0xf]
        %v952 = vld [vmem:[#allocation2 + $0x98] sm:$0xf]
        %v953 = vld [vmem:[#allocation2 + $0xa4] sm:$0xf]
        %v954 = vld [vmem:[#allocation2 + $0xb0] sm:$0xf]
        %v955 = vld [vmem:[#allocation2 + $0xbc] sm:$0xf]
        %v972 = vunpack.c.l.b16 %v908
        %v973 = vunpack.c.l.b16 %v909
        %v974 = vunpack.c.l.b16 %v910
        %v975 = vunpack.c.l.b16 %v911
        %v976 = vunpack.c.l.b16 %v912
        %v977 = vunpack.c.l.b16 %v913
        %v978 = vunpack.c.l.b16 %v914
        %v979 = vunpack.c.l.b16 %v915
        %v980 = vunpack.c.l.b16 %v916
        %v981 = vunpack.c.l.b16 %v917
        %v982 = vunpack.c.l.b16 %v918
        %v983 = vunpack.c.l.b16 %v919
        %v984 = vunpack.c.l.b16 %v920
        %v985 = vunpack.c.l.b16 %v921
        %v986 = vunpack.c.l.b16 %v922
        %v987 = vunpack.c.l.b16 %v923
        %v988 = vpack.c.b16 %v973, %v972
        %v989 = vpack.c.b16 %v975, %v974
        %v990 = vpack.c.b16 %v977, %v976
        %v991 = vpack.c.b16 %v979, %v978
        %v992 = vpack.c.b16 %v981, %v980
        %v993 = vpack.c.b16 %v983, %v982
        %v994 = vpack.c.b16 %v985, %v984
        %v995 = vpack.c.b16 %v987, %v986
        %v1020 = vunpack.c.l.b16 %v924
        %v1021 = vunpack.c.l.b16 %v925
        %v1022 = vunpack.c.l.b16 %v926
        %v1023 = vunpack.c.l.b16 %v927
        %v1024 = vunpack.c.l.b16 %v928
        %v1025 = vunpack.c.l.b16 %v929
        %v1026 = vunpack.c.l.b16 %v930
        %v1027 = vunpack.c.l.b16 %v931
        %v1028 = vunpack.c.l.b16 %v932
        %v1029 = vunpack.c.l.b16 %v933
        %v1030 = vunpack.c.l.b16 %v934
        %v1031 = vunpack.c.l.b16 %v935
        %v1032 = vunpack.c.l.b16 %v936
        %v1033 = vunpack.c.l.b16 %v937
        %v1034 = vunpack.c.l.b16 %v938
        %v1035 = vunpack.c.l.b16 %v939
        %v1036 = vpack.c.b16 %v1021, %v1020
        %v1037 = vpack.c.b16 %v1023, %v1022
        %v1038 = vpack.c.b16 %v1025, %v1024
        %v1039 = vpack.c.b16 %v1027, %v1026
        %v1040 = vpack.c.b16 %v1029, %v1028
        %v1041 = vpack.c.b16 %v1031, %v1030
        %v1042 = vpack.c.b16 %v1033, %v1032
        %v1043 = vpack.c.b16 %v1035, %v1034
        %1052 = vmatpush.bf16.xpose.msra.mxu0 %v1043
        %1053 = vmatpush.bf16.xpose.msra.mxu0 %v1042
        %1054 = vmatpush.bf16.xpose.msra.mxu0 %v1041
        %1055 = vmatpush.bf16.xpose.msra.mxu0 %v1040
        %1056 = vmatpush.bf16.xpose.msra.mxu0 %v1039
        %1057 = vmatpush.bf16.xpose.msra.mxu0 %v1038
        %1058 = vmatpush.bf16.xpose.msra.mxu0 %v1037
        %1059 = vmatpush.bf16.xpose.msra.mxu0 %v1036
        %1060 = vmatmul.bf16.gmra.mxu0 %v988
        %v1061 = vpop.f32.mrf.mxu0
        %v1062 = vadd.f32 0.0, %v1061
        %v1063 = vpop.f32.mrf.mxu0
        %v1064 = vadd.f32 0.0, %v1063
        %1065 = vmatmul.bf16.gmra.mxu0 %v989
        %v1066 = vpop.f32.mrf.mxu0
        %v1067 = vadd.f32 0.0, %v1066
        %v1068 = vpop.f32.mrf.mxu0
        %v1069 = vadd.f32 0.0, %v1068
        %1070 = vmatmul.bf16.gmra.mxu0 %v990
        %v1071 = vpop.f32.mrf.mxu0
        %v1072 = vadd.f32 0.0, %v1071
        %v1073 = vpop.f32.mrf.mxu0
        %v1074 = vadd.f32 0.0, %v1073
        %1075 = vmatmul.bf16.gmra.mxu0 %v991
        %v1076 = vpop.f32.mrf.mxu0
        %v1077 = vadd.f32 0.0, %v1076
        %v1078 = vpop.f32.mrf.mxu0
        %v1079 = vadd.f32 0.0, %v1078
        %1080 = vmatmul.bf16.gmra.mxu0 %v992
        %v1081 = vpop.f32.mrf.mxu0
        %v1082 = vadd.f32 0.0, %v1081
        %v1083 = vpop.f32.mrf.mxu0
        %v1084 = vadd.f32 0.0, %v1083
        %1085 = vmatmul.bf16.gmra.mxu0 %v993
        %v1086 = vpop.f32.mrf.mxu0
        %v1087 = vadd.f32 0.0, %v1086
        %v1088 = vpop.f32.mrf.mxu0
        %v1089 = vadd.f32 0.0, %v1088
        %1090 = vmatmul.bf16.gmra.mxu0 %v994
        %v1091 = vpop.f32.mrf.mxu0
        %v1092 = vadd.f32 0.0, %v1091
        %v1093 = vpop.f32.mrf.mxu0
        %v1094 = vadd.f32 0.0, %v1093
        %1095 = vmatmul.bf16.gmra.mxu0 %v995
        %v1096 = vpop.f32.mrf.mxu0
        %v1097 = vadd.f32 0.0, %v1096
        %v1098 = vpop.f32.mrf.mxu0
        %v1099 = vadd.f32 0.0, %v1098
        %1100 = vdwg.mxu0
        %1101 = vmax.xlane.f32.xlu0 %v1062
        %v1102 = vpop.xlane.xlu0 %1101
        %1103 = vmax.xlane.f32.xlu0 %v1064
        %v1104 = vpop.xlane.xlu0 %1103
        %1105 = vmax.xlane.f32.xlu0 %v1067
        %v1106 = vpop.xlane.xlu0 %1105
        %1107 = vmax.xlane.f32.xlu0 %v1069
        %v1108 = vpop.xlane.xlu0 %1107
        %1109 = vmax.xlane.f32.xlu0 %v1072
        %v1110 = vpop.xlane.xlu0 %1109
        %1111 = vmax.xlane.f32.xlu0 %v1074
        %v1112 = vpop.xlane.xlu0 %1111
        %1113 = vmax.xlane.f32.xlu0 %v1077
        %v1114 = vpop.xlane.xlu0 %1113
        %1115 = vmax.xlane.f32.xlu0 %v1079
        %v1116 = vpop.xlane.xlu0 %1115
        %1117 = vmax.xlane.f32.xlu0 %v1082
        %v1118 = vpop.xlane.xlu0 %1117
        %1119 = vmax.xlane.f32.xlu0 %v1084
        %v1120 = vpop.xlane.xlu0 %1119
        %1121 = vmax.xlane.f32.xlu0 %v1087
        %v1122 = vpop.xlane.xlu0 %1121
        %1123 = vmax.xlane.f32.xlu0 %v1089
        %v1124 = vpop.xlane.xlu0 %1123
        %1125 = vmax.xlane.f32.xlu0 %v1092
        %v1126 = vpop.xlane.xlu0 %1125
        %1127 = vmax.xlane.f32.xlu0 %v1094
        %v1128 = vpop.xlane.xlu0 %1127
        %1129 = vmax.xlane.f32.xlu0 %v1097
        %v1130 = vpop.xlane.xlu0 %1129
        %1131 = vmax.xlane.f32.xlu0 %v1099
        %v1132 = vpop.xlane.xlu0 %1131
        %v1133 = vsub.f32 %v1062, %v1102
        %v1134 = vsub.f32 %v1064, %v1104
        %v1135 = vsub.f32 %v1067, %v1106
        %v1136 = vsub.f32 %v1069, %v1108
        %v1137 = vsub.f32 %v1072, %v1110
        %v1138 = vsub.f32 %v1074, %v1112
        %v1139 = vsub.f32 %v1077, %v1114
        %v1140 = vsub.f32 %v1079, %v1116
        %v1141 = vsub.f32 %v1082, %v1118
        %v1142 = vsub.f32 %v1084, %v1120
        %v1143 = vsub.f32 %v1087, %v1122
        %v1144 = vsub.f32 %v1089, %v1124
        %v1145 = vsub.f32 %v1092, %v1126
        %v1146 = vsub.f32 %v1094, %v1128
        %v1147 = vsub.f32 %v1097, %v1130
        %v1148 = vsub.f32 %v1099, %v1132
        %v1149 = vmul.f32 %v1133, 1.442695
        %v1150 = vpow.pop %v1149
        %v1151 = vmul.f32 %v1134, 1.442695
        %v1152 = vpow.pop %v1151
        %v1153 = vmul.f32 %v1135, 1.442695
        %v1154 = vpow.pop %v1153
        %v1155 = vmul.f32 %v1136, 1.442695
        %v1156 = vpow.pop %v1155
        %v1157 = vmul.f32 %v1137, 1.442695
        %v1158 = vpow.pop %v1157
        %v1159 = vmul.f32 %v1138, 1.442695
        %v1160 = vpow.pop %v1159
        %v1161 = vmul.f32 %v1139, 1.442695
        %v1162 = vpow.pop %v1161
        %v1163 = vmul.f32 %v1140, 1.442695
        %v1164 = vpow.pop %v1163
        %v1165 = vmul.f32 %v1141, 1.442695
        %v1166 = vpow.pop %v1165
        %v1167 = vmul.f32 %v1142, 1.442695
        %v1168 = vpow.pop %v1167
        %v1169 = vmul.f32 %v1143, 1.442695
        %v1170 = vpow.pop %v1169
        %v1171 = vmul.f32 %v1144, 1.442695
        %v1172 = vpow.pop %v1171
        %v1173 = vmul.f32 %v1145, 1.442695
        %v1174 = vpow.pop %v1173
        %v1175 = vmul.f32 %v1146, 1.442695
        %v1176 = vpow.pop %v1175
        %v1177 = vmul.f32 %v1147, 1.442695
        %v1178 = vpow.pop %v1177
        %v1179 = vmul.f32 %v1148, 1.442695
        %v1180 = vpow.pop %v1179
        %1181 = vadd.xlane.f32.xlu0 %v1150
        %v1182 = vpop.xlane.xlu0 %1181
        %1183 = vadd.xlane.f32.xlu0 %v1152
        %v1184 = vpop.xlane.xlu0 %1183
        %1185 = vadd.xlane.f32.xlu0 %v1154
        %v1186 = vpop.xlane.xlu0 %1185
        %1187 = vadd.xlane.f32.xlu0 %v1156
        %v1188 = vpop.xlane.xlu0 %1187
        %1189 = vadd.xlane.f32.xlu0 %v1158
        %v1190 = vpop.xlane.xlu0 %1189
        %1191 = vadd.xlane.f32.xlu0 %v1160
        %v1192 = vpop.xlane.xlu0 %1191
        %1193 = vadd.xlane.f32.xlu0 %v1162
        %v1194 = vpop.xlane.xlu0 %1193
        %1195 = vadd.xlane.f32.xlu0 %v1164
        %v1196 = vpop.xlane.xlu0 %1195
        %1197 = vadd.xlane.f32.xlu0 %v1166
        %v1198 = vpop.xlane.xlu0 %1197
        %1199 = vadd.xlane.f32.xlu0 %v1168
        %v1200 = vpop.xlane.xlu0 %1199
        %1201 = vadd.xlane.f32.xlu0 %v1170
        %v1202 = vpop.xlane.xlu0 %1201
        %1203 = vadd.xlane.f32.xlu0 %v1172
        %v1204 = vpop.xlane.xlu0 %1203
        %1205 = vadd.xlane.f32.xlu0 %v1174
        %v1206 = vpop.xlane.xlu0 %1205
        %1207 = vadd.xlane.f32.xlu0 %v1176
        %v1208 = vpop.xlane.xlu0 %1207
        %1209 = vadd.xlane.f32.xlu0 %v1178
        %v1210 = vpop.xlane.xlu0 %1209
        %1211 = vadd.xlane.f32.xlu0 %v1180
        %v1212 = vpop.xlane.xlu0 %1211
        %v1213 = vrcp.pop %v1182
        %v1214 = vrcp.pop %v1184
        %v1215 = vrcp.pop %v1186
        %v1216 = vrcp.pop %v1188
        %v1217 = vrcp.pop %v1190
        %v1218 = vrcp.pop %v1192
        %v1219 = vrcp.pop %v1194
        %v1220 = vrcp.pop %v1196
        %v1221 = vrcp.pop %v1198
        %v1222 = vrcp.pop %v1200
        %v1223 = vrcp.pop %v1202
        %v1224 = vrcp.pop %v1204
        %v1225 = vrcp.pop %v1206
        %v1226 = vrcp.pop %v1208
        %v1227 = vrcp.pop %v1210
        %v1228 = vrcp.pop %v1212
        %v1229 = vmul.f32 %v1150, %v1213
        %v1230 = vmul.f32 %v1152, %v1214
        %v1231 = vmul.f32 %v1154, %v1215
        %v1232 = vmul.f32 %v1156, %v1216
        %v1233 = vmul.f32 %v1158, %v1217
        %v1234 = vmul.f32 %v1160, %v1218
        %v1235 = vmul.f32 %v1162, %v1219
        %v1236 = vmul.f32 %v1164, %v1220
        %v1237 = vmul.f32 %v1166, %v1221
        %v1238 = vmul.f32 %v1168, %v1222
        %v1239 = vmul.f32 %v1170, %v1223
        %v1240 = vmul.f32 %v1172, %v1224
        %v1241 = vmul.f32 %v1174, %v1225
        %v1242 = vmul.f32 %v1176, %v1226
        %v1243 = vmul.f32 %v1178, %v1227
        %v1244 = vmul.f32 %v1180, %v1228
        %v1245 = vpack.c.bf16 %v1229, %v1229
        %v1246 = vpack.c.bf16 %v1230, %v1230
        %v1247 = vpack.c.bf16 %v1231, %v1231
        %v1248 = vpack.c.bf16 %v1232, %v1232
        %v1249 = vpack.c.bf16 %v1233, %v1233
        %v1250 = vpack.c.bf16 %v1234, %v1234
        %v1251 = vpack.c.bf16 %v1235, %v1235
        %v1252 = vpack.c.bf16 %v1236, %v1236
        %v1253 = vpack.c.bf16 %v1237, %v1237
        %v1254 = vpack.c.bf16 %v1238, %v1238
        %v1255 = vpack.c.bf16 %v1239, %v1239
        %v1256 = vpack.c.bf16 %v1240, %v1240
        %v1257 = vpack.c.bf16 %v1241, %v1241
        %v1258 = vpack.c.bf16 %v1242, %v1242
        %v1259 = vpack.c.bf16 %v1243, %v1243
        %v1260 = vpack.c.bf16 %v1244, %v1244
        %v1277 = vunpack.c.l.b16 %v1245
        %v1278 = vunpack.c.l.b16 %v1246
        %v1279 = vunpack.c.l.b16 %v1247
        %v1280 = vunpack.c.l.b16 %v1248
        %v1281 = vunpack.c.l.b16 %v1249
        %v1282 = vunpack.c.l.b16 %v1250
        %v1283 = vunpack.c.l.b16 %v1251
        %v1284 = vunpack.c.l.b16 %v1252
        %v1285 = vunpack.c.l.b16 %v1253
        %v1286 = vunpack.c.l.b16 %v1254
        %v1287 = vunpack.c.l.b16 %v1255
        %v1288 = vunpack.c.l.b16 %v1256
        %v1289 = vunpack.c.l.b16 %v1257
        %v1290 = vunpack.c.l.b16 %v1258
        %v1291 = vunpack.c.l.b16 %v1259
        %v1292 = vunpack.c.l.b16 %v1260
        %v1293 = vpack.c.b16 %v1278, %v1277
        %v1294 = vpack.c.b16 %v1280, %v1279
        %v1295 = vpack.c.b16 %v1282, %v1281
        %v1296 = vpack.c.b16 %v1284, %v1283
        %v1297 = vpack.c.b16 %v1286, %v1285
        %v1298 = vpack.c.b16 %v1288, %v1287
        %v1299 = vpack.c.b16 %v1290, %v1289
        %v1300 = vpack.c.b16 %v1292, %v1291
        %v1325 = vunpack.c.l.b16 %v940
        %v1326 = vunpack.c.l.b16 %v941
        %v1327 = vunpack.c.l.b16 %v942
        %v1328 = vunpack.c.l.b16 %v943
        %v1329 = vunpack.c.l.b16 %v944
        %v1330 = vunpack.c.l.b16 %v945
        %v1331 = vunpack.c.l.b16 %v946
        %v1332 = vunpack.c.l.b16 %v947
        %v1333 = vunpack.c.l.b16 %v948
        %v1334 = vunpack.c.l.b16 %v949
        %v1335 = vunpack.c.l.b16 %v950
        %v1336 = vunpack.c.l.b16 %v951
        %v1337 = vunpack.c.l.b16 %v952
        %v1338 = vunpack.c.l.b16 %v953
        %v1339 = vunpack.c.l.b16 %v954
        %v1340 = vunpack.c.l.b16 %v955
        %v1341 = vpack.c.b16 %v1326, %v1325
        %v1342 = vpack.c.b16 %v1328, %v1327
        %v1343 = vpack.c.b16 %v1330, %v1329
        %v1344 = vpack.c.b16 %v1332, %v1331
        %v1345 = vpack.c.b16 %v1334, %v1333
        %v1346 = vpack.c.b16 %v1336, %v1335
        %v1347 = vpack.c.b16 %v1338, %v1337
        %v1348 = vpack.c.b16 %v1340, %v1339
        %1357 = vmatpush.bf16.msra.mxu0 %v1348
        %1358 = vmatpush.bf16.msra.mxu0 %v1347
        %1359 = vmatpush.bf16.msra.mxu0 %v1346
        %1360 = vmatpush.bf16.msra.mxu0 %v1345
        %1361 = vmatpush.bf16.msra.mxu0 %v1344
        %1362 = vmatpush.bf16.msra.mxu0 %v1343
        %1363 = vmatpush.bf16.msra.mxu0 %v1342
        %1364 = vmatpush.bf16.msra.mxu0 %v1341
        %1365 = vmatmul.bf16.gmra.mxu0 %v1293
        %v1366 = vpop.f32.mrf.mxu0
        %v1367 = vadd.f32 0.0, %v1366
        %v1368 = vpop.f32.mrf.mxu0
        %v1369 = vadd.f32 0.0, %v1368
        %1370 = vmatmul.bf16.gmra.mxu0 %v1294
        %v1371 = vpop.f32.mrf.mxu0
        %v1372 = vadd.f32 0.0, %v1371
        %v1373 = vpop.f32.mrf.mxu0
        %v1374 = vadd.f32 0.0, %v1373
        %1375 = vmatmul.bf16.gmra.mxu0 %v1295
        %v1376 = vpop.f32.mrf.mxu0
        %v1377 = vadd.f32 0.0, %v1376
        %v1378 = vpop.f32.mrf.mxu0
        %v1379 = vadd.f32 0.0, %v1378
        %1380 = vmatmul.bf16.gmra.mxu0 %v1296
        %v1381 = vpop.f32.mrf.mxu0
        %v1382 = vadd.f32 0.0, %v1381
        %v1383 = vpop.f32.mrf.mxu0
        %v1384 = vadd.f32 0.0, %v1383
        %1385 = vmatmul.bf16.gmra.mxu0 %v1297
        %v1386 = vpop.f32.mrf.mxu0
        %v1387 = vadd.f32 0.0, %v1386
        %v1388 = vpop.f32.mrf.mxu0
        %v1389 = vadd.f32 0.0, %v1388
        %1390 = vmatmul.bf16.gmra.mxu0 %v1298
        %v1391 = vpop.f32.mrf.mxu0
        %v1392 = vadd.f32 0.0, %v1391
        %v1393 = vpop.f32.mrf.mxu0
        %v1394 = vadd.f32 0.0, %v1393
        %1395 = vmatmul.bf16.gmra.mxu0 %v1299
        %v1396 = vpop.f32.mrf.mxu0
        %v1397 = vadd.f32 0.0, %v1396
        %v1398 = vpop.f32.mrf.mxu0
        %v1399 = vadd.f32 0.0, %v1398
        %1400 = vmatmul.bf16.gmra.mxu0 %v1300
        %v1401 = vpop.f32.mrf.mxu0
        %v1402 = vadd.f32 0.0, %v1401
        %v1403 = vpop.f32.mrf.mxu0
        %v1404 = vadd.f32 0.0, %v1403
        %1405 = vdwg.mxu0
        %v1406 = vpack.c.bf16 %v1369, %v1367
        %v1407 = vpack.c.bf16 %v1374, %v1372
        %v1408 = vpack.c.bf16 %v1379, %v1377
        %v1409 = vpack.c.bf16 %v1384, %v1382
        %v1410 = vpack.c.bf16 %v1389, %v1387
        %v1411 = vpack.c.bf16 %v1394, %v1392
        %v1412 = vpack.c.bf16 %v1399, %v1397
        %v1413 = vpack.c.bf16 %v1404, %v1402
        %v1414 = vld [vmem:[%s3] sm:$0xf]
        %v1415 = vld [vmem:[%s3 + $0x4] sm:$0xf]
        %v1416 = vld [vmem:[%s3 + $0x8] sm:$0xf]
        %v1417 = vld [vmem:[%s3 + $0xc] sm:$0xf]
        %v1418 = vld [vmem:[%s3 + $0x10] sm:$0xf]
        %v1419 = vld [vmem:[%s3 + $0x14] sm:$0xf]
        %v1420 = vld [vmem:[%s3 + $0x18] sm:$0xf]
        %v1421 = vld [vmem:[%s3 + $0x1c] sm:$0xf]
        %v1422 = vld [vmem:[%s3 + $0x20] sm:$0xf]
        %v1423 = vld [vmem:[%s3 + $0x24] sm:$0xf]
        %v1424 = vld [vmem:[%s3 + $0x28] sm:$0xf]
        %v1425 = vld [vmem:[%s3 + $0x2c] sm:$0xf]
        %v1426 = vld [vmem:[%s3 + $0x30] sm:$0xf]
        %v1427 = vld [vmem:[%s3 + $0x34] sm:$0xf]
        %v1428 = vld [vmem:[%s3 + $0x38] sm:$0xf]
        %v1429 = vld [vmem:[%s3 + $0x3c] sm:$0xf]
        %v1430 = vld [vmem:[%s4] sm:$0x1]
        %v1432 = vperm.slane %v1430, 0
        %v1450 = vunpack.c.l.b16 %v1414
        %v1451 = vunpack.c.l.b16 %v1415
        %v1452 = vunpack.c.l.b16 %v1416
        %v1453 = vunpack.c.l.b16 %v1417
        %v1454 = vunpack.c.l.b16 %v1418
        %v1455 = vunpack.c.l.b16 %v1419
        %v1456 = vunpack.c.l.b16 %v1420
        %v1457 = vunpack.c.l.b16 %v1421
        %v1458 = vunpack.c.l.b16 %v1422
        %v1459 = vunpack.c.l.b16 %v1423
        %v1460 = vunpack.c.l.b16 %v1424
        %v1461 = vunpack.c.l.b16 %v1425
        %v1462 = vunpack.c.l.b16 %v1426
        %v1463 = vunpack.c.l.b16 %v1427
        %v1464 = vunpack.c.l.b16 %v1428
        %v1465 = vunpack.c.l.b16 %v1429
        %v1466 = vpack.c.b16 %v1451, %v1450
        %v1467 = vpack.c.b16 %v1453, %v1452
        %v1468 = vpack.c.b16 %v1455, %v1454
        %v1469 = vpack.c.b16 %v1457, %v1456
        %v1470 = vpack.c.b16 %v1459, %v1458
        %v1471 = vpack.c.b16 %v1461, %v1460
        %v1472 = vpack.c.b16 %v1463, %v1462
        %v1473 = vpack.c.b16 %v1465, %v1464
        %1482 = vmatpush.bf16.msra.mxu0 %v1473
        %1483 = vmatpush.bf16.msra.mxu0 %v1472
        %1484 = vmatpush.bf16.msra.mxu0 %v1471
        %1485 = vmatpush.bf16.msra.mxu0 %v1470
        %1486 = vmatpush.bf16.msra.mxu0 %v1469
        %1487 = vmatpush.bf16.msra.mxu0 %v1468
        %1488 = vmatpush.bf16.msra.mxu0 %v1467
        %1489 = vmatpush.bf16.msra.mxu0 %v1466
        %1490 = vmatmul.bf16.gmra.mxu0 %v1406
        %v1491 = vpop.f32.mrf.mxu0
        %v1492 = vadd.f32 %v1432, %v1491
        %v1493 = vpop.f32.mrf.mxu0
        %v1494 = vadd.f32 %v1432, %v1493
        %1495 = vmatmul.bf16.gmra.mxu0 %v1407
        %v1496 = vpop.f32.mrf.mxu0
        %v1497 = vadd.f32 %v1432, %v1496
        %v1498 = vpop.f32.mrf.mxu0
        %v1499 = vadd.f32 %v1432, %v1498
        %1500 = vmatmul.bf16.gmra.mxu0 %v1408
        %v1501 = vpop.f32.mrf.mxu0
        %v1502 = vadd.f32 %v1432, %v1501
        %v1503 = vpop.f32.mrf.mxu0
        %v1504 = vadd.f32 %v1432, %v1503
        %1505 = vmatmul.bf16.gmra.mxu0 %v1409
        %v1506 = vpop.f32.mrf.mxu0
        %v1507 = vadd.f32 %v1432, %v1506
        %v1508 = vpop.f32.mrf.mxu0
        %v1509 = vadd.f32 %v1432, %v1508
        %1510 = vmatmul.bf16.gmra.mxu0 %v1410
        %v1511 = vpop.f32.mrf.mxu0
        %v1512 = vadd.f32 %v1432, %v1511
        %v1513 = vpop.f32.mrf.mxu0
        %v1514 = vadd.f32 %v1432, %v1513
        %1515 = vmatmul.bf16.gmra.mxu0 %v1411
        %v1516 = vpop.f32.mrf.mxu0
        %v1517 = vadd.f32 %v1432, %v1516
        %v1518 = vpop.f32.mrf.mxu0
        %v1519 = vadd.f32 %v1432, %v1518
        %1520 = vmatmul.bf16.gmra.mxu0 %v1412
        %v1521 = vpop.f32.mrf.mxu0
        %v1522 = vadd.f32 %v1432, %v1521
        %v1523 = vpop.f32.mrf.mxu0
        %v1524 = vadd.f32 %v1432, %v1523
        %1525 = vmatmul.bf16.gmra.mxu0 %v1413
        %v1526 = vpop.f32.mrf.mxu0
        %v1527 = vadd.f32 %v1432, %v1526
        %v1528 = vpop.f32.mrf.mxu0
        %v1529 = vadd.f32 %v1432, %v1528
        %1530 = vdwg.mxu0
        %s1531 = scalar_lea.vmem %s492, %s902
        %v1532 = vld [vmem:[%s1531] sm:$0xff]
        %v1533 = vld [vmem:[%s1531 + $0x8] sm:$0xff]
        %v1534 = vld [vmem:[%s1531 + $0x10] sm:$0xff]
        %v1535 = vld [vmem:[%s1531 + $0x18] sm:$0xff]
        %v1536 = vld [vmem:[%s1531 + $0x20] sm:$0xff]
        %v1537 = vld [vmem:[%s1531 + $0x28] sm:$0xff]
        %v1538 = vld [vmem:[%s1531 + $0x30] sm:$0xff]
        %v1539 = vld [vmem:[%s1531 + $0x38] sm:$0xff]
        %v1540 = vld [vmem:[%s1531 + $0x40] sm:$0xff]
        %v1541 = vld [vmem:[%s1531 + $0x48] sm:$0xff]
        %v1542 = vld [vmem:[%s1531 + $0x50] sm:$0xff]
        %v1543 = vld [vmem:[%s1531 + $0x58] sm:$0xff]
        %v1544 = vld [vmem:[%s1531 + $0x60] sm:$0xff]
        %v1545 = vld [vmem:[%s1531 + $0x68] sm:$0xff]
        %v1546 = vld [vmem:[%s1531 + $0x70] sm:$0xff]
        %v1547 = vld [vmem:[%s1531 + $0x78] sm:$0xff]
        %v1548 = vadd.f32 %v1532, %v1492
        %v1549 = vadd.f32 %v1533, %v1494
        %v1550 = vadd.f32 %v1534, %v1497
        %v1551 = vadd.f32 %v1535, %v1499
        %v1552 = vadd.f32 %v1536, %v1502
        %v1553 = vadd.f32 %v1537, %v1504
        %v1554 = vadd.f32 %v1538, %v1507
        %v1555 = vadd.f32 %v1539, %v1509
        %v1556 = vadd.f32 %v1540, %v1512
        %v1557 = vadd.f32 %v1541, %v1514
        %v1558 = vadd.f32 %v1542, %v1517
        %v1559 = vadd.f32 %v1543, %v1519
        %v1560 = vadd.f32 %v1544, %v1522
        %v1561 = vadd.f32 %v1545, %v1524
        %v1562 = vadd.f32 %v1546, %v1527
        %v1563 = vadd.f32 %v1547, %v1529
        %v1564 = vld [vmem:[%s5] sm:$0x1]
        %v1565 = vld [vmem:[%s6] sm:$0x1]
        %1566 = vadd.xlane.f32.xlu0 %v1548
        %v1567 = vpop.xlane.xlu0 %1566
        %1568 = vadd.xlane.f32.xlu0 %v1549
        %v1569 = vpop.xlane.xlu0 %1568
        %1570 = vadd.xlane.f32.xlu0 %v1550
        %v1571 = vpop.xlane.xlu0 %1570
        %1572 = vadd.xlane.f32.xlu0 %v1551
        %v1573 = vpop.xlane.xlu0 %1572
        %1574 = vadd.xlane.f32.xlu0 %v1552
        %v1575 = vpop.xlane.xlu0 %1574
        %1576 = vadd.xlane.f32.xlu0 %v1553
        %v1577 = vpop.xlane.xlu0 %1576
        %1578 = vadd.xlane.f32.xlu0 %v1554
        %v1579 = vpop.xlane.xlu0 %1578
        %1580 = vadd.xlane.f32.xlu0 %v1555
        %v1581 = vpop.xlane.xlu0 %1580
        %1582 = vadd.xlane.f32.xlu0 %v1556
        %v1583 = vpop.xlane.xlu0 %1582
        %1584 = vadd.xlane.f32.xlu0 %v1557
        %v1585 = vpop.xlane.xlu0 %1584
        %1586 = vadd.xlane.f32.xlu0 %v1558
        %v1587 = vpop.xlane.xlu0 %1586
        %1588 = vadd.xlane.f32.xlu0 %v1559
        %v1589 = vpop.xlane.xlu0 %1588
        %1590 = vadd.xlane.f32.xlu0 %v1560
        %v1591 = vpop.xlane.xlu0 %1590
        %1592 = vadd.xlane.f32.xlu0 %v1561
        %v1593 = vpop.xlane.xlu0 %1592
        %1594 = vadd.xlane.f32.xlu0 %v1562
        %v1595 = vpop.xlane.xlu0 %1594
        %1596 = vadd.xlane.f32.xlu0 %v1563
        %v1597 = vpop.xlane.xlu0 %1596
        %v1598 = vrcp.pop 128.0
        %v1599 = vmul.f32 128.0, %v1598
        %v1600 = vsub.f32 1.0, %v1599
        %v1601 = vmul.f32 %v1598, %v1600
        %v1602 = vadd.f32 %v1598, %v1601
        %vm1603 = vweird.f32 %v1598
        %v1604 = vsel %vm1603, %v1598, %v1602
        %v1605 = vmul.f32 %v1567, %v1604
        %v1606 = vmul.f32 %v1569, %v1604
        %v1607 = vmul.f32 %v1571, %v1604
        %v1608 = vmul.f32 %v1573, %v1604
        %v1609 = vmul.f32 %v1575, %v1604
        %v1610 = vmul.f32 %v1577, %v1604
        %v1611 = vmul.f32 %v1579, %v1604
        %v1612 = vmul.f32 %v1581, %v1604
        %v1613 = vmul.f32 %v1583, %v1604
        %v1614 = vmul.f32 %v1585, %v1604
        %v1615 = vmul.f32 %v1587, %v1604
        %v1616 = vmul.f32 %v1589, %v1604
        %v1617 = vmul.f32 %v1591, %v1604
        %v1618 = vmul.f32 %v1593, %v1604
        %v1619 = vmul.f32 %v1595, %v1604
        %v1620 = vmul.f32 %v1597, %v1604
        %v1621 = vsub.f32 %v1548, %v1605
        %v1622 = vsub.f32 %v1549, %v1606
        %v1623 = vsub.f32 %v1550, %v1607
        %v1624 = vsub.f32 %v1551, %v1608
        %v1625 = vsub.f32 %v1552, %v1609
        %v1626 = vsub.f32 %v1553, %v1610
        %v1627 = vsub.f32 %v1554, %v1611
        %v1628 = vsub.f32 %v1555, %v1612
        %v1629 = vsub.f32 %v1556, %v1613
        %v1630 = vsub.f32 %v1557, %v1614
        %v1631 = vsub.f32 %v1558, %v1615
        %v1632 = vsub.f32 %v1559, %v1616
        %v1633 = vsub.f32 %v1560, %v1617
        %v1634 = vsub.f32 %v1561, %v1618
        %v1635 = vsub.f32 %v1562, %v1619
        %v1636 = vsub.f32 %v1563, %v1620
        %v1637 = vmul.f32 %v1621, %v1621
        %v1638 = vmul.f32 %v1622, %v1622
        %v1639 = vmul.f32 %v1623, %v1623
        %v1640 = vmul.f32 %v1624, %v1624
        %v1641 = vmul.f32 %v1625, %v1625
        %v1642 = vmul.f32 %v1626, %v1626
        %v1643 = vmul.f32 %v1627, %v1627
        %v1644 = vmul.f32 %v1628, %v1628
        %v1645 = vmul.f32 %v1629, %v1629
        %v1646 = vmul.f32 %v1630, %v1630
        %v1647 = vmul.f32 %v1631, %v1631
        %v1648 = vmul.f32 %v1632, %v1632
        %v1649 = vmul.f32 %v1633, %v1633
        %v1650 = vmul.f32 %v1634, %v1634
        %v1651 = vmul.f32 %v1635, %v1635
        %v1652 = vmul.f32 %v1636, %v1636
        %1653 = vadd.xlane.f32.xlu0 %v1637
        %v1654 = vpop.xlane.xlu0 %1653
        %1655 = vadd.xlane.f32.xlu0 %v1638
        %v1656 = vpop.xlane.xlu0 %1655
        %1657 = vadd.xlane.f32.xlu0 %v1639
        %v1658 = vpop.xlane.xlu0 %1657
        %1659 = vadd.xlane.f32.xlu0 %v1640
        %v1660 = vpop.xlane.xlu0 %1659
        %1661 = vadd.xlane.f32.xlu0 %v1641
        %v1662 = vpop.xlane.xlu0 %1661
        %1663 = vadd.xlane.f32.xlu0 %v1642
        %v1664 = vpop.xlane.xlu0 %1663
        %1665 = vadd.xlane.f32.xlu0 %v1643
        %v1666 = vpop.xlane.xlu0 %1665
        %1667 = vadd.xlane.f32.xlu0 %v1644
        %v1668 = vpop.xlane.xlu0 %1667
        %1669 = vadd.xlane.f32.xlu0 %v1645
        %v1670 = vpop.xlane.xlu0 %1669
        %1671 = vadd.xlane.f32.xlu0 %v1646
        %v1672 = vpop.xlane.xlu0 %1671
        %1673 = vadd.xlane.f32.xlu0 %v1647
        %v1674 = vpop.xlane.xlu0 %1673
        %1675 = vadd.xlane.f32.xlu0 %v1648
        %v1676 = vpop.xlane.xlu0 %1675
        %1677 = vadd.xlane.f32.xlu0 %v1649
        %v1678 = vpop.xlane.xlu0 %1677
        %1679 = vadd.xlane.f32.xlu0 %v1650
        %v1680 = vpop.xlane.xlu0 %1679
        %1681 = vadd.xlane.f32.xlu0 %v1651
        %v1682 = vpop.xlane.xlu0 %1681
        %1683 = vadd.xlane.f32.xlu0 %v1652
        %v1684 = vpop.xlane.xlu0 %1683
        %v1685 = vmul.f32 %v1654, %v1604
        %v1686 = vmul.f32 %v1656, %v1604
        %v1687 = vmul.f32 %v1658, %v1604
        %v1688 = vmul.f32 %v1660, %v1604
        %v1689 = vmul.f32 %v1662, %v1604
        %v1690 = vmul.f32 %v1664, %v1604
        %v1691 = vmul.f32 %v1666, %v1604
        %v1692 = vmul.f32 %v1668, %v1604
        %v1693 = vmul.f32 %v1670, %v1604
        %v1694 = vmul.f32 %v1672, %v1604
        %v1695 = vmul.f32 %v1674, %v1604
        %v1696 = vmul.f32 %v1676, %v1604
        %v1697 = vmul.f32 %v1678, %v1604
        %v1698 = vmul.f32 %v1680, %v1604
        %v1699 = vmul.f32 %v1682, %v1604
        %v1700 = vmul.f32 %v1684, %v1604
        %v1701 = vadd.f32 %v1685, 1e-05
        %v1702 = vadd.f32 %v1686, 1e-05
        %v1703 = vadd.f32 %v1687, 1e-05
        %v1704 = vadd.f32 %v1688, 1e-05
        %v1705 = vadd.f32 %v1689, 1e-05
        %v1706 = vadd.f32 %v1690, 1e-05
        %v1707 = vadd.f32 %v1691, 1e-05
        %v1708 = vadd.f32 %v1692, 1e-05
        %v1709 = vadd.f32 %v1693, 1e-05
        %v1710 = vadd.f32 %v1694, 1e-05
        %v1711 = vadd.f32 %v1695, 1e-05
        %v1712 = vadd.f32 %v1696, 1e-05
        %v1713 = vadd.f32 %v1697, 1e-05
        %v1714 = vadd.f32 %v1698, 1e-05
        %v1715 = vadd.f32 %v1699, 1e-05
        %v1716 = vadd.f32 %v1700, 1e-05
        %v1717 = vrsqrt.pop %v1701
        %v1718 = vmul.f32 %v1717, %v1701
        %v1719 = vmul.f32 %v1718, %v1717
        %v1720 = vmul.f32 0.5, %v1719
        %v1721 = vsub.f32 1.5, %v1720
        %v1722 = vmul.f32 %v1717, %v1721
        %vm1723 = vweird.f32 %v1701
        %vm1724 = vweird.f32 %v1717
        %vm1725 = vmor %vm1723, %vm1724
        %v1726 = vsel %vm1725, %v1717, %v1722
        %v1727 = vrsqrt.pop %v1702
        %v1728 = vmul.f32 %v1727, %v1702
        %v1729 = vmul.f32 %v1728, %v1727
        %v1730 = vmul.f32 0.5, %v1729
        %v1731 = vsub.f32 1.5, %v1730
        %v1732 = vmul.f32 %v1727, %v1731
        %vm1733 = vweird.f32 %v1702
        %vm1734 = vweird.f32 %v1727
        %vm1735 = vmor %vm1733, %vm1734
        %v1736 = vsel %vm1735, %v1727, %v1732
        %v1737 = vrsqrt.pop %v1703
        %v1738 = vmul.f32 %v1737, %v1703
        %v1739 = vmul.f32 %v1738, %v1737
        %v1740 = vmul.f32 0.5, %v1739
        %v1741 = vsub.f32 1.5, %v1740
        %v1742 = vmul.f32 %v1737, %v1741
        %vm1743 = vweird.f32 %v1703
        %vm1744 = vweird.f32 %v1737
        %vm1745 = vmor %vm1743, %vm1744
        %v1746 = vsel %vm1745, %v1737, %v1742
        %v1747 = vrsqrt.pop %v1704
        %v1748 = vmul.f32 %v1747, %v1704
        %v1749 = vmul.f32 %v1748, %v1747
        %v1750 = vmul.f32 0.5, %v1749
        %v1751 = vsub.f32 1.5, %v1750
        %v1752 = vmul.f32 %v1747, %v1751
        %vm1753 = vweird.f32 %v1704
        %vm1754 = vweird.f32 %v1747
        %vm1755 = vmor %vm1753, %vm1754
        %v1756 = vsel %vm1755, %v1747, %v1752
        %v1757 = vrsqrt.pop %v1705
        %v1758 = vmul.f32 %v1757, %v1705
        %v1759 = vmul.f32 %v1758, %v1757
        %v1760 = vmul.f32 0.5, %v1759
        %v1761 = vsub.f32 1.5, %v1760
        %v1762 = vmul.f32 %v1757, %v1761
        %vm1763 = vweird.f32 %v1705
        %vm1764 = vweird.f32 %v1757
        %vm1765 = vmor %vm1763, %vm1764
        %v1766 = vsel %vm1765, %v1757, %v1762
        %v1767 = vrsqrt.pop %v1706
        %v1768 = vmul.f32 %v1767, %v1706
        %v1769 = vmul.f32 %v1768, %v1767
        %v1770 = vmul.f32 0.5, %v1769
        %v1771 = vsub.f32 1.5, %v1770
        %v1772 = vmul.f32 %v1767, %v1771
        %vm1773 = vweird.f32 %v1706
        %vm1774 = vweird.f32 %v1767
        %vm1775 = vmor %vm1773, %vm1774
        %v1776 = vsel %vm1775, %v1767, %v1772
        %v1777 = vrsqrt.pop %v1707
        %v1778 = vmul.f32 %v1777, %v1707
        %v1779 = vmul.f32 %v1778, %v1777
        %v1780 = vmul.f32 0.5, %v1779
        %v1781 = vsub.f32 1.5, %v1780
        %v1782 = vmul.f32 %v1777, %v1781
        %vm1783 = vweird.f32 %v1707
        %vm1784 = vweird.f32 %v1777
        %vm1785 = vmor %vm1783, %vm1784
        %v1786 = vsel %vm1785, %v1777, %v1782
        %v1787 = vrsqrt.pop %v1708
        %v1788 = vmul.f32 %v1787, %v1708
        %v1789 = vmul.f32 %v1788, %v1787
        %v1790 = vmul.f32 0.5, %v1789
        %v1791 = vsub.f32 1.5, %v1790
        %v1792 = vmul.f32 %v1787, %v1791
        %vm1793 = vweird.f32 %v1708
        %vm1794 = vweird.f32 %v1787
        %vm1795 = vmor %vm1793, %vm1794
        %v1796 = vsel %vm1795, %v1787, %v1792
        %v1797 = vrsqrt.pop %v1709
        %v1798 = vmul.f32 %v1797, %v1709
        %v1799 = vmul.f32 %v1798, %v1797
        %v1800 = vmul.f32 0.5, %v1799
        %v1801 = vsub.f32 1.5, %v1800
        %v1802 = vmul.f32 %v1797, %v1801
        %vm1803 = vweird.f32 %v1709
        %vm1804 = vweird.f32 %v1797
        %vm1805 = vmor %vm1803, %vm1804
        %v1806 = vsel %vm1805, %v1797, %v1802
        %v1807 = vrsqrt.pop %v1710
        %v1808 = vmul.f32 %v1807, %v1710
        %v1809 = vmul.f32 %v1808, %v1807
        %v1810 = vmul.f32 0.5, %v1809
        %v1811 = vsub.f32 1.5, %v1810
        %v1812 = vmul.f32 %v1807, %v1811
        %vm1813 = vweird.f32 %v1710
        %vm1814 = vweird.f32 %v1807
        %vm1815 = vmor %vm1813, %vm1814
        %v1816 = vsel %vm1815, %v1807, %v1812
        %v1817 = vrsqrt.pop %v1711
        %v1818 = vmul.f32 %v1817, %v1711
        %v1819 = vmul.f32 %v1818, %v1817
        %v1820 = vmul.f32 0.5, %v1819
        %v1821 = vsub.f32 1.5, %v1820
        %v1822 = vmul.f32 %v1817, %v1821
        %vm1823 = vweird.f32 %v1711
        %vm1824 = vweird.f32 %v1817
        %vm1825 = vmor %vm1823, %vm1824
        %v1826 = vsel %vm1825, %v1817, %v1822
        %v1827 = vrsqrt.pop %v1712
        %v1828 = vmul.f32 %v1827, %v1712
        %v1829 = vmul.f32 %v1828, %v1827
        %v1830 = vmul.f32 0.5, %v1829
        %v1831 = vsub.f32 1.5, %v1830
        %v1832 = vmul.f32 %v1827, %v1831
        %vm1833 = vweird.f32 %v1712
        %vm1834 = vweird.f32 %v1827
        %vm1835 = vmor %vm1833, %vm1834
        %v1836 = vsel %vm1835, %v1827, %v1832
        %v1837 = vrsqrt.pop %v1713
        %v1838 = vmul.f32 %v1837, %v1713
        %v1839 = vmul.f32 %v1838, %v1837
        %v1840 = vmul.f32 0.5, %v1839
        %v1841 = vsub.f32 1.5, %v1840
        %v1842 = vmul.f32 %v1837, %v1841
        %vm1843 = vweird.f32 %v1713
        %vm1844 = vweird.f32 %v1837
        %vm1845 = vmor %vm1843, %vm1844
        %v1846 = vsel %vm1845, %v1837, %v1842
        %v1847 = vrsqrt.pop %v1714
        %v1848 = vmul.f32 %v1847, %v1714
        %v1849 = vmul.f32 %v1848, %v1847
        %v1850 = vmul.f32 0.5, %v1849
        %v1851 = vsub.f32 1.5, %v1850
        %v1852 = vmul.f32 %v1847, %v1851
        %vm1853 = vweird.f32 %v1714
        %vm1854 = vweird.f32 %v1847
        %vm1855 = vmor %vm1853, %vm1854
        %v1856 = vsel %vm1855, %v1847, %v1852
        %v1857 = vrsqrt.pop %v1715
        %v1858 = vmul.f32 %v1857, %v1715
        %v1859 = vmul.f32 %v1858, %v1857
        %v1860 = vmul.f32 0.5, %v1859
        %v1861 = vsub.f32 1.5, %v1860
        %v1862 = vmul.f32 %v1857, %v1861
        %vm1863 = vweird.f32 %v1715
        %vm1864 = vweird.f32 %v1857
        %vm1865 = vmor %vm1863, %vm1864
        %v1866 = vsel %vm1865, %v1857, %v1862
        %v1867 = vrsqrt.pop %v1716
        %v1868 = vmul.f32 %v1867, %v1716
        %v1869 = vmul.f32 %v1868, %v1867
        %v1870 = vmul.f32 0.5, %v1869
        %v1871 = vsub.f32 1.5, %v1870
        %v1872 = vmul.f32 %v1867, %v1871
        %vm1873 = vweird.f32 %v1716
        %vm1874 = vweird.f32 %v1867
        %vm1875 = vmor %vm1873, %vm1874
        %v1876 = vsel %vm1875, %v1867, %v1872
        %v1877 = vmul.f32 %v1621, %v1726
        %v1878 = vmul.f32 %v1622, %v1736
        %v1879 = vmul.f32 %v1623, %v1746
        %v1880 = vmul.f32 %v1624, %v1756
        %v1881 = vmul.f32 %v1625, %v1766
        %v1882 = vmul.f32 %v1626, %v1776
        %v1883 = vmul.f32 %v1627, %v1786
        %v1884 = vmul.f32 %v1628, %v1796
        %v1885 = vmul.f32 %v1629, %v1806
        %v1886 = vmul.f32 %v1630, %v1816
        %v1887 = vmul.f32 %v1631, %v1826
        %v1888 = vmul.f32 %v1632, %v1836
        %v1889 = vmul.f32 %v1633, %v1846
        %v1890 = vmul.f32 %v1634, %v1856
        %v1891 = vmul.f32 %v1635, %v1866
        %v1892 = vmul.f32 %v1636, %v1876
        %v1894 = vperm.slane %v1564, 0
        %v1896 = vmul.f32 %v1877, %v1894
        %v1897 = vmul.f32 %v1878, %v1894
        %v1898 = vmul.f32 %v1879, %v1894
        %v1899 = vmul.f32 %v1880, %v1894
        %v1900 = vmul.f32 %v1881, %v1894
        %v1901 = vmul.f32 %v1882, %v1894
        %v1902 = vmul.f32 %v1883, %v1894
        %v1903 = vmul.f32 %v1884, %v1894
        %v1904 = vmul.f32 %v1885, %v1894
        %v1905 = vmul.f32 %v1886, %v1894
        %v1906 = vmul.f32 %v1887, %v1894
        %v1907 = vmul.f32 %v1888, %v1894
        %v1908 = vmul.f32 %v1889, %v1894
        %v1909 = vmul.f32 %v1890, %v1894
        %v1910 = vmul.f32 %v1891, %v1894
        %v1911 = vmul.f32 %v1892, %v1894
        %v1913 = vperm.slane %v1565, 0
        %v1915 = vadd.f32 %v1896, %v1913
        %v1916 = vadd.f32 %v1897, %v1913
        %v1917 = vadd.f32 %v1898, %v1913
        %v1918 = vadd.f32 %v1899, %v1913
        %v1919 = vadd.f32 %v1900, %v1913
        %v1920 = vadd.f32 %v1901, %v1913
        %v1921 = vadd.f32 %v1902, %v1913
        %v1922 = vadd.f32 %v1903, %v1913
        %v1923 = vadd.f32 %v1904, %v1913
        %v1924 = vadd.f32 %v1905, %v1913
        %v1925 = vadd.f32 %v1906, %v1913
        %v1926 = vadd.f32 %v1907, %v1913
        %v1927 = vadd.f32 %v1908, %v1913
        %v1928 = vadd.f32 %v1909, %v1913
        %v1929 = vadd.f32 %v1910, %v1913
        %v1930 = vadd.f32 %v1911, %v1913
        %v1931 = vpack.c.bf16 %v1916, %v1915
        %v1932 = vpack.c.bf16 %v1918, %v1917
        %v1933 = vpack.c.bf16 %v1920, %v1919
        %v1934 = vpack.c.bf16 %v1922, %v1921
        %v1935 = vpack.c.bf16 %v1924, %v1923
        %v1936 = vpack.c.bf16 %v1926, %v1925
        %v1937 = vpack.c.bf16 %v1928, %v1927
        %v1938 = vpack.c.bf16 %v1930, %v1929
        %v1939 = vld [vmem:[%s7] sm:$0xff]
        %v1940 = vld [vmem:[%s7 + $0x8] sm:$0xff]
        %v1941 = vld [vmem:[%s7 + $0x10] sm:$0xff]
        %v1942 = vld [vmem:[%s7 + $0x18] sm:$0xff]
        %v1943 = vld [vmem:[%s7 + $0x20] sm:$0xff]
        %v1944 = vld [vmem:[%s7 + $0x28] sm:$0xff]
        %v1945 = vld [vmem:[%s7 + $0x30] sm:$0xff]
        %v1946 = vld [vmem:[%s7 + $0x38] sm:$0xff]
        %v1947 = vld [vmem:[%s7 + $0x40] sm:$0xff]
        %v1948 = vld [vmem:[%s7 + $0x48] sm:$0xff]
        %v1949 = vld [vmem:[%s7 + $0x50] sm:$0xff]
        %v1950 = vld [vmem:[%s7 + $0x58] sm:$0xff]
        %v1951 = vld [vmem:[%s7 + $0x60] sm:$0xff]
        %v1952 = vld [vmem:[%s7 + $0x68] sm:$0xff]
        %v1953 = vld [vmem:[%s7 + $0x70] sm:$0xff]
        %v1954 = vld [vmem:[%s7 + $0x78] sm:$0xff]
        %v1955 = vld [vmem:[%s8] sm:$0x3]
        %v1957 = vperm.slane %v1955, 0
        %v1958 = vperm.slane %v1955, 1
        %v1977 = vunpack.c.l.b16 %v1939
        %v1978 = vunpack.c.h.b16 %v1939
        %v1979 = vunpack.c.l.b16 %v1940
        %v1980 = vunpack.c.h.b16 %v1940
        %v1981 = vunpack.c.l.b16 %v1941
        %v1982 = vunpack.c.h.b16 %v1941
        %v1983 = vunpack.c.l.b16 %v1942
        %v1984 = vunpack.c.h.b16 %v1942
        %v1985 = vunpack.c.l.b16 %v1943
        %v1986 = vunpack.c.h.b16 %v1943
        %v1987 = vunpack.c.l.b16 %v1944
        %v1988 = vunpack.c.h.b16 %v1944
        %v1989 = vunpack.c.l.b16 %v1945
        %v1990 = vunpack.c.h.b16 %v1945
        %v1991 = vunpack.c.l.b16 %v1946
        %v1992 = vunpack.c.h.b16 %v1946
        %v1993 = vunpack.c.l.b16 %v1947
        %v1994 = vunpack.c.h.b16 %v1947
        %v1995 = vunpack.c.l.b16 %v1948
        %v1996 = vunpack.c.h.b16 %v1948
        %v1997 = vunpack.c.l.b16 %v1949
        %v1998 = vunpack.c.h.b16 %v1949
        %v1999 = vunpack.c.l.b16 %v1950
        %v2000 = vunpack.c.h.b16 %v1950
        %v2001 = vunpack.c.l.b16 %v1951
        %v2002 = vunpack.c.h.b16 %v1951
        %v2003 = vunpack.c.l.b16 %v1952
        %v2004 = vunpack.c.h.b16 %v1952
        %v2005 = vunpack.c.l.b16 %v1953
        %v2006 = vunpack.c.h.b16 %v1953
        %v2007 = vunpack.c.l.b16 %v1954
        %v2008 = vunpack.c.h.b16 %v1954
        %v2009 = vpack.c.b16 %v1979, %v1977
        %v2010 = vpack.c.b16 %v1980, %v1978
        %v2011 = vpack.c.b16 %v1983, %v1981
        %v2012 = vpack.c.b16 %v1984, %v1982
        %v2013 = vpack.c.b16 %v1987, %v1985
        %v2014 = vpack.c.b16 %v1988, %v1986
        %v2015 = vpack.c.b16 %v1991, %v1989
        %v2016 = vpack.c.b16 %v1992, %v1990
        %v2017 = vpack.c.b16 %v1995, %v1993
        %v2018 = vpack.c.b16 %v1996, %v1994
        %v2019 = vpack.c.b16 %v1999, %v1997
        %v2020 = vpack.c.b16 %v2000, %v1998
        %v2021 = vpack.c.b16 %v2003, %v2001
        %v2022 = vpack.c.b16 %v2004, %v2002
        %v2023 = vpack.c.b16 %v2007, %v2005
        %v2024 = vpack.c.b16 %v2008, %v2006
        %2041 = vmatpush.bf16.msra.mxu0 %v2023
        %2042 = vmatpush.bf16.msra.mxu0 %v2021
        %2043 = vmatpush.bf16.msra.mxu0 %v2019
        %2044 = vmatpush.bf16.msra.mxu0 %v2017
        %2045 = vmatpush.bf16.msra.mxu0 %v2015
        %2046 = vmatpush.bf16.msra.mxu0 %v2013
        %2047 = vmatpush.bf16.msra.mxu0 %v2011
        %2048 = vmatpush.bf16.msra.mxu0 %v2009
        %2049 = vmatmul.bf16.gmra.mxu0 %v1931
        %v2050 = vpop.f32.mrf.mxu0
        %v2051 = vadd.f32 %v1957, %v2050
        %v2052 = vpop.f32.mrf.mxu0
        %v2053 = vadd.f32 %v1957, %v2052
        %2054 = vmatmul.bf16.gmra.mxu0 %v1932
        %v2055 = vpop.f32.mrf.mxu0
        %v2056 = vadd.f32 %v1957, %v2055
        %v2057 = vpop.f32.mrf.mxu0
        %v2058 = vadd.f32 %v1957, %v2057
        %2059 = vmatmul.bf16.gmra.mxu0 %v1933
        %v2060 = vpop.f32.mrf.mxu0
        %v2061 = vadd.f32 %v1957, %v2060
        %v2062 = vpop.f32.mrf.mxu0
        %v2063 = vadd.f32 %v1957, %v2062
        %2064 = vmatmul.bf16.gmra.mxu0 %v1934
        %v2065 = vpop.f32.mrf.mxu0
        %v2066 = vadd.f32 %v1957, %v2065
        %v2067 = vpop.f32.mrf.mxu0
        %v2068 = vadd.f32 %v1957, %v2067
        %2069 = vmatmul.bf16.gmra.mxu0 %v1935
        %v2070 = vpop.f32.mrf.mxu0
        %v2071 = vadd.f32 %v1957, %v2070
        %v2072 = vpop.f32.mrf.mxu0
        %v2073 = vadd.f32 %v1957, %v2072
        %2074 = vmatmul.bf16.gmra.mxu0 %v1936
        %v2075 = vpop.f32.mrf.mxu0
        %v2076 = vadd.f32 %v1957, %v2075
        %v2077 = vpop.f32.mrf.mxu0
        %v2078 = vadd.f32 %v1957, %v2077
        %2079 = vmatmul.bf16.gmra.mxu0 %v1937
        %v2080 = vpop.f32.mrf.mxu0
        %v2081 = vadd.f32 %v1957, %v2080
        %v2082 = vpop.f32.mrf.mxu0
        %v2083 = vadd.f32 %v1957, %v2082
        %2084 = vmatmul.bf16.gmra.mxu0 %v1938
        %v2085 = vpop.f32.mrf.mxu0
        %v2086 = vadd.f32 %v1957, %v2085
        %v2087 = vpop.f32.mrf.mxu0
        %v2088 = vadd.f32 %v1957, %v2087
        %2089 = vdwg.mxu0
        %2090 = vmatpush.bf16.msra.mxu0 %v2024
        %2091 = vmatpush.bf16.msra.mxu0 %v2022
        %2092 = vmatpush.bf16.msra.mxu0 %v2020
        %2093 = vmatpush.bf16.msra.mxu0 %v2018
        %2094 = vmatpush.bf16.msra.mxu0 %v2016
        %2095 = vmatpush.bf16.msra.mxu0 %v2014
        %2096 = vmatpush.bf16.msra.mxu0 %v2012
        %2097 = vmatpush.bf16.msra.mxu0 %v2010
        %2098 = vmatmul.bf16.gmra.mxu0 %v1931
        %v2099 = vpop.f32.mrf.mxu0
        %v2100 = vadd.f32 %v1958, %v2099
        %v2101 = vpop.f32.mrf.mxu0
        %v2102 = vadd.f32 %v1958, %v2101
        %2103 = vmatmul.bf16.gmra.mxu0 %v1932
        %v2104 = vpop.f32.mrf.mxu0
        %v2105 = vadd.f32 %v1958, %v2104
        %v2106 = vpop.f32.mrf.mxu0
        %v2107 = vadd.f32 %v1958, %v2106
        %2108 = vmatmul.bf16.gmra.mxu0 %v1933
        %v2109 = vpop.f32.mrf.mxu0
        %v2110 = vadd.f32 %v1958, %v2109
        %v2111 = vpop.f32.mrf.mxu0
        %v2112 = vadd.f32 %v1958, %v2111
        %2113 = vmatmul.bf16.gmra.mxu0 %v1934
        %v2114 = vpop.f32.mrf.mxu0
        %v2115 = vadd.f32 %v1958, %v2114
        %v2116 = vpop.f32.mrf.mxu0
        %v2117 = vadd.f32 %v1958, %v2116
        %2118 = vmatmul.bf16.gmra.mxu0 %v1935
        %v2119 = vpop.f32.mrf.mxu0
        %v2120 = vadd.f32 %v1958, %v2119
        %v2121 = vpop.f32.mrf.mxu0
        %v2122 = vadd.f32 %v1958, %v2121
        %2123 = vmatmul.bf16.gmra.mxu0 %v1936
        %v2124 = vpop.f32.mrf.mxu0
        %v2125 = vadd.f32 %v1958, %v2124
        %v2126 = vpop.f32.mrf.mxu0
        %v2127 = vadd.f32 %v1958, %v2126
        %2128 = vmatmul.bf16.gmra.mxu0 %v1937
        %v2129 = vpop.f32.mrf.mxu0
        %v2130 = vadd.f32 %v1958, %v2129
        %v2131 = vpop.f32.mrf.mxu0
        %v2132 = vadd.f32 %v1958, %v2131
        %2133 = vmatmul.bf16.gmra.mxu0 %v1938
        %v2134 = vpop.f32.mrf.mxu0
        %v2135 = vadd.f32 %v1958, %v2134
        %v2136 = vpop.f32.mrf.mxu0
        %v2137 = vadd.f32 %v1958, %v2136
        %2138 = vdwg.mxu0
        %v2139 = vmax.f32 %v2051, 0.0
        %v2140 = vmax.f32 %v2100, 0.0
        %v2141 = vmax.f32 %v2053, 0.0
        %v2142 = vmax.f32 %v2102, 0.0
        %v2143 = vmax.f32 %v2056, 0.0
        %v2144 = vmax.f32 %v2105, 0.0
        %v2145 = vmax.f32 %v2058, 0.0
        %v2146 = vmax.f32 %v2107, 0.0
        %v2147 = vmax.f32 %v2061, 0.0
        %v2148 = vmax.f32 %v2110, 0.0
        %v2149 = vmax.f32 %v2063, 0.0
        %v2150 = vmax.f32 %v2112, 0.0
        %v2151 = vmax.f32 %v2066, 0.0
        %v2152 = vmax.f32 %v2115, 0.0
        %v2153 = vmax.f32 %v2068, 0.0
        %v2154 = vmax.f32 %v2117, 0.0
        %v2155 = vmax.f32 %v2071, 0.0
        %v2156 = vmax.f32 %v2120, 0.0
        %v2157 = vmax.f32 %v2073, 0.0
        %v2158 = vmax.f32 %v2122, 0.0
        %v2159 = vmax.f32 %v2076, 0.0
        %v2160 = vmax.f32 %v2125, 0.0
        %v2161 = vmax.f32 %v2078, 0.0
        %v2162 = vmax.f32 %v2127, 0.0
        %v2163 = vmax.f32 %v2081, 0.0
        %v2164 = vmax.f32 %v2130, 0.0
        %v2165 = vmax.f32 %v2083, 0.0
        %v2166 = vmax.f32 %v2132, 0.0
        %v2167 = vmax.f32 %v2086, 0.0
        %v2168 = vmax.f32 %v2135, 0.0
        %v2169 = vmax.f32 %v2088, 0.0
        %v2170 = vmax.f32 %v2137, 0.0
        %v2171 = vpack.c.bf16 %v2141, %v2139
        %v2172 = vpack.c.bf16 %v2142, %v2140
        %v2173 = vpack.c.bf16 %v2145, %v2143
        %v2174 = vpack.c.bf16 %v2146, %v2144
        %v2175 = vpack.c.bf16 %v2149, %v2147
        %v2176 = vpack.c.bf16 %v2150, %v2148
        %v2177 = vpack.c.bf16 %v2153, %v2151
        %v2178 = vpack.c.bf16 %v2154, %v2152
        %v2179 = vpack.c.bf16 %v2157, %v2155
        %v2180 = vpack.c.bf16 %v2158, %v2156
        %v2181 = vpack.c.bf16 %v2161, %v2159
        %v2182 = vpack.c.bf16 %v2162, %v2160
        %v2183 = vpack.c.bf16 %v2165, %v2163
        %v2184 = vpack.c.bf16 %v2166, %v2164
        %v2185 = vpack.c.bf16 %v2169, %v2167
        %v2186 = vpack.c.bf16 %v2170, %v2168
        %v2187 = vld [vmem:[%s9] sm:$0xf]
        %v2188 = vld [vmem:[%s9 + $0x4] sm:$0xf]
        %v2189 = vld [vmem:[%s9 + $0x8] sm:$0xf]
        %v2190 = vld [vmem:[%s9 + $0xc] sm:$0xf]
        %v2191 = vld [vmem:[%s9 + $0x10] sm:$0xf]
        %v2192 = vld [vmem:[%s9 + $0x14] sm:$0xf]
        %v2193 = vld [vmem:[%s9 + $0x18] sm:$0xf]
        %v2194 = vld [vmem:[%s9 + $0x1c] sm:$0xf]
        %v2195 = vld [vmem:[%s9 + $0x20] sm:$0xf]
        %v2196 = vld [vmem:[%s9 + $0x24] sm:$0xf]
        %v2197 = vld [vmem:[%s9 + $0x28] sm:$0xf]
        %v2198 = vld [vmem:[%s9 + $0x2c] sm:$0xf]
        %v2199 = vld [vmem:[%s9 + $0x30] sm:$0xf]
        %v2200 = vld [vmem:[%s9 + $0x34] sm:$0xf]
        %v2201 = vld [vmem:[%s9 + $0x38] sm:$0xf]
        %v2202 = vld [vmem:[%s9 + $0x3c] sm:$0xf]
        %v2203 = vld [vmem:[%s9 + $0x40] sm:$0xf]
        %v2204 = vld [vmem:[%s9 + $0x44] sm:$0xf]
        %v2205 = vld [vmem:[%s9 + $0x48] sm:$0xf]
        %v2206 = vld [vmem:[%s9 + $0x4c] sm:$0xf]
        %v2207 = vld [vmem:[%s9 + $0x50] sm:$0xf]
        %v2208 = vld [vmem:[%s9 + $0x54] sm:$0xf]
        %v2209 = vld [vmem:[%s9 + $0x58] sm:$0xf]
        %v2210 = vld [vmem:[%s9 + $0x5c] sm:$0xf]
        %v2211 = vld [vmem:[%s9 + $0x60] sm:$0xf]
        %v2212 = vld [vmem:[%s9 + $0x64] sm:$0xf]
        %v2213 = vld [vmem:[%s9 + $0x68] sm:$0xf]
        %v2214 = vld [vmem:[%s9 + $0x6c] sm:$0xf]
        %v2215 = vld [vmem:[%s9 + $0x70] sm:$0xf]
        %v2216 = vld [vmem:[%s9 + $0x74] sm:$0xf]
        %v2217 = vld [vmem:[%s9 + $0x78] sm:$0xf]
        %v2218 = vld [vmem:[%s9 + $0x7c] sm:$0xf]
        %v2219 = vld [vmem:[%s10] sm:$0x1]
        %v2221 = vperm.slane %v2219, 0
        %v2255 = vunpack.c.l.b16 %v2187
        %v2256 = vunpack.c.l.b16 %v2188
        %v2257 = vunpack.c.l.b16 %v2189
        %v2258 = vunpack.c.l.b16 %v2190
        %v2259 = vunpack.c.l.b16 %v2191
        %v2260 = vunpack.c.l.b16 %v2192
        %v2261 = vunpack.c.l.b16 %v2193
        %v2262 = vunpack.c.l.b16 %v2194
        %v2263 = vunpack.c.l.b16 %v2195
        %v2264 = vunpack.c.l.b16 %v2196
        %v2265 = vunpack.c.l.b16 %v2197
        %v2266 = vunpack.c.l.b16 %v2198
        %v2267 = vunpack.c.l.b16 %v2199
        %v2268 = vunpack.c.l.b16 %v2200
        %v2269 = vunpack.c.l.b16 %v2201
        %v2270 = vunpack.c.l.b16 %v2202
        %v2271 = vunpack.c.l.b16 %v2203
        %v2272 = vunpack.c.l.b16 %v2204
        %v2273 = vunpack.c.l.b16 %v2205
        %v2274 = vunpack.c.l.b16 %v2206
        %v2275 = vunpack.c.l.b16 %v2207
        %v2276 = vunpack.c.l.b16 %v2208
        %v2277 = vunpack.c.l.b16 %v2209
        %v2278 = vunpack.c.l.b16 %v2210
        %v2279 = vunpack.c.l.b16 %v2211
        %v2280 = vunpack.c.l.b16 %v2212
        %v2281 = vunpack.c.l.b16 %v2213
        %v2282 = vunpack.c.l.b16 %v2214
        %v2283 = vunpack.c.l.b16 %v2215
        %v2284 = vunpack.c.l.b16 %v2216
        %v2285 = vunpack.c.l.b16 %v2217
        %v2286 = vunpack.c.l.b16 %v2218
        %v2287 = vpack.c.b16 %v2256, %v2255
        %v2288 = vpack.c.b16 %v2258, %v2257
        %v2289 = vpack.c.b16 %v2260, %v2259
        %v2290 = vpack.c.b16 %v2262, %v2261
        %v2291 = vpack.c.b16 %v2264, %v2263
        %v2292 = vpack.c.b16 %v2266, %v2265
        %v2293 = vpack.c.b16 %v2268, %v2267
        %v2294 = vpack.c.b16 %v2270, %v2269
        %v2295 = vpack.c.b16 %v2272, %v2271
        %v2296 = vpack.c.b16 %v2274, %v2273
        %v2297 = vpack.c.b16 %v2276, %v2275
        %v2298 = vpack.c.b16 %v2278, %v2277
        %v2299 = vpack.c.b16 %v2280, %v2279
        %v2300 = vpack.c.b16 %v2282, %v2281
        %v2301 = vpack.c.b16 %v2284, %v2283
        %v2302 = vpack.c.b16 %v2286, %v2285
        %2319 = vmatpush.bf16.msra.mxu0 %v2294
        %2320 = vmatpush.bf16.msra.mxu0 %v2293
        %2321 = vmatpush.bf16.msra.mxu0 %v2292
        %2322 = vmatpush.bf16.msra.mxu0 %v2291
        %2323 = vmatpush.bf16.msra.mxu0 %v2290
        %2324 = vmatpush.bf16.msra.mxu0 %v2289
        %2325 = vmatpush.bf16.msra.mxu0 %v2288
        %2326 = vmatpush.bf16.msra.mxu0 %v2287
        %2327 = vmatmul.bf16.gmra.mxu0 %v2171
        %v2328 = vpop.f32.mrf.mxu0
        %v2329 = vadd.f32 %v2221, %v2328
        %v2330 = vpop.f32.mrf.mxu0
        %v2331 = vadd.f32 %v2221, %v2330
        %2332 = vmatmul.bf16.gmra.mxu0 %v2173
        %v2333 = vpop.f32.mrf.mxu0
        %v2334 = vadd.f32 %v2221, %v2333
        %v2335 = vpop.f32.mrf.mxu0
        %v2336 = vadd.f32 %v2221, %v2335
        %2337 = vmatmul.bf16.gmra.mxu0 %v2175
        %v2338 = vpop.f32.mrf.mxu0
        %v2339 = vadd.f32 %v2221, %v2338
        %v2340 = vpop.f32.mrf.mxu0
        %v2341 = vadd.f32 %v2221, %v2340
        %2342 = vmatmul.bf16.gmra.mxu0 %v2177
        %v2343 = vpop.f32.mrf.mxu0
        %v2344 = vadd.f32 %v2221, %v2343
        %v2345 = vpop.f32.mrf.mxu0
        %v2346 = vadd.f32 %v2221, %v2345
        %2347 = vmatmul.bf16.gmra.mxu0 %v2179
        %v2348 = vpop.f32.mrf.mxu0
        %v2349 = vadd.f32 %v2221, %v2348
        %v2350 = vpop.f32.mrf.mxu0
        %v2351 = vadd.f32 %v2221, %v2350
        %2352 = vmatmul.bf16.gmra.mxu0 %v2181
        %v2353 = vpop.f32.mrf.mxu0
        %v2354 = vadd.f32 %v2221, %v2353
        %v2355 = vpop.f32.mrf.mxu0
        %v2356 = vadd.f32 %v2221, %v2355
        %2357 = vmatmul.bf16.gmra.mxu0 %v2183
        %v2358 = vpop.f32.mrf.mxu0
        %v2359 = vadd.f32 %v2221, %v2358
        %v2360 = vpop.f32.mrf.mxu0
        %v2361 = vadd.f32 %v2221, %v2360
        %2362 = vmatmul.bf16.gmra.mxu0 %v2185
        %v2363 = vpop.f32.mrf.mxu0
        %v2364 = vadd.f32 %v2221, %v2363
        %v2365 = vpop.f32.mrf.mxu0
        %v2366 = vadd.f32 %v2221, %v2365
        %2367 = vdwg.mxu0
        %2368 = vmatpush.bf16.msra.mxu0 %v2302
        %2369 = vmatpush.bf16.msra.mxu0 %v2301
        %2370 = vmatpush.bf16.msra.mxu0 %v2300
        %2371 = vmatpush.bf16.msra.mxu0 %v2299
        %2372 = vmatpush.bf16.msra.mxu0 %v2298
        %2373 = vmatpush.bf16.msra.mxu0 %v2297
        %2374 = vmatpush.bf16.msra.mxu0 %v2296
        %2375 = vmatpush.bf16.msra.mxu0 %v2295
        %2376 = vmatmul.bf16.gmra.mxu0 %v2172
        %v2377 = vpop.f32.mrf.mxu0
        %v2378 = vadd.f32 %v2329, %v2377
        %v2379 = vpop.f32.mrf.mxu0
        %v2380 = vadd.f32 %v2331, %v2379
        %2381 = vmatmul.bf16.gmra.mxu0 %v2174
        %v2382 = vpop.f32.mrf.mxu0
        %v2383 = vadd.f32 %v2334, %v2382
        %v2384 = vpop.f32.mrf.mxu0
        %v2385 = vadd.f32 %v2336, %v2384
        %2386 = vmatmul.bf16.gmra.mxu0 %v2176
        %v2387 = vpop.f32.mrf.mxu0
        %v2388 = vadd.f32 %v2339, %v2387
        %v2389 = vpop.f32.mrf.mxu0
        %v2390 = vadd.f32 %v2341, %v2389
        %2391 = vmatmul.bf16.gmra.mxu0 %v2178
        %v2392 = vpop.f32.mrf.mxu0
        %v2393 = vadd.f32 %v2344, %v2392
        %v2394 = vpop.f32.mrf.mxu0
        %v2395 = vadd.f32 %v2346, %v2394
        %2396 = vmatmul.bf16.gmra.mxu0 %v2180
        %v2397 = vpop.f32.mrf.mxu0
        %v2398 = vadd.f32 %v2349, %v2397
        %v2399 = vpop.f32.mrf.mxu0
        %v2400 = vadd.f32 %v2351, %v2399
        %2401 = vmatmul.bf16.gmra.mxu0 %v2182
        %v2402 = vpop.f32.mrf.mxu0
        %v2403 = vadd.f32 %v2354, %v2402
        %v2404 = vpop.f32.mrf.mxu0
        %v2405 = vadd.f32 %v2356, %v2404
        %2406 = vmatmul.bf16.gmra.mxu0 %v2184
        %v2407 = vpop.f32.mrf.mxu0
        %v2408 = vadd.f32 %v2359, %v2407
        %v2409 = vpop.f32.mrf.mxu0
        %v2410 = vadd.f32 %v2361, %v2409
        %2411 = vmatmul.bf16.gmra.mxu0 %v2186
        %v2412 = vpop.f32.mrf.mxu0
        %v2413 = vadd.f32 %v2364, %v2412
        %v2414 = vpop.f32.mrf.mxu0
        %v2415 = vadd.f32 %v2366, %v2414
        %2416 = vdwg.mxu0
        %v2417 = vadd.f32 %v1915, %v2378
        %v2418 = vadd.f32 %v1916, %v2380
        %v2419 = vadd.f32 %v1917, %v2383
        %v2420 = vadd.f32 %v1918, %v2385
        %v2421 = vadd.f32 %v1919, %v2388
        %v2422 = vadd.f32 %v1920, %v2390
        %v2423 = vadd.f32 %v1921, %v2393
        %v2424 = vadd.f32 %v1922, %v2395
        %v2425 = vadd.f32 %v1923, %v2398
        %v2426 = vadd.f32 %v1924, %v2400
        %v2427 = vadd.f32 %v1925, %v2403
        %v2428 = vadd.f32 %v1926, %v2405
        %v2429 = vadd.f32 %v1927, %v2408
        %v2430 = vadd.f32 %v1928, %v2410
        %v2431 = vadd.f32 %v1929, %v2413
        %v2432 = vadd.f32 %v1930, %v2415
        %v2433 = vld [vmem:[%s11] sm:$0x1]
        %v2434 = vld [vmem:[%s12] sm:$0x1]
        %2435 = vadd.xlane.f32.xlu0 %v2417
        %v2436 = vpop.xlane.xlu0 %2435
        %2437 = vadd.xlane.f32.xlu0 %v2418
        %v2438 = vpop.xlane.xlu0 %2437
        %2439 = vadd.xlane.f32.xlu0 %v2419
        %v2440 = vpop.xlane.xlu0 %2439
        %2441 = vadd.xlane.f32.xlu0 %v2420
        %v2442 = vpop.xlane.xlu0 %2441
        %2443 = vadd.xlane.f32.xlu0 %v2421
        %v2444 = vpop.xlane.xlu0 %2443
        %2445 = vadd.xlane.f32.xlu0 %v2422
        %v2446 = vpop.xlane.xlu0 %2445
        %2447 = vadd.xlane.f32.xlu0 %v2423
        %v2448 = vpop.xlane.xlu0 %2447
        %2449 = vadd.xlane.f32.xlu0 %v2424
        %v2450 = vpop.xlane.xlu0 %2449
        %2451 = vadd.xlane.f32.xlu0 %v2425
        %v2452 = vpop.xlane.xlu0 %2451
        %2453 = vadd.xlane.f32.xlu0 %v2426
        %v2454 = vpop.xlane.xlu0 %2453
        %2455 = vadd.xlane.f32.xlu0 %v2427
        %v2456 = vpop.xlane.xlu0 %2455
        %2457 = vadd.xlane.f32.xlu0 %v2428
        %v2458 = vpop.xlane.xlu0 %2457
        %2459 = vadd.xlane.f32.xlu0 %v2429
        %v2460 = vpop.xlane.xlu0 %2459
        %2461 = vadd.xlane.f32.xlu0 %v2430
        %v2462 = vpop.xlane.xlu0 %2461
        %2463 = vadd.xlane.f32.xlu0 %v2431
        %v2464 = vpop.xlane.xlu0 %2463
        %2465 = vadd.xlane.f32.xlu0 %v2432
        %v2466 = vpop.xlane.xlu0 %2465
        %v2467 = vmul.f32 %v2436, %v1604
        %v2468 = vmul.f32 %v2438, %v1604
        %v2469 = vmul.f32 %v2440, %v1604
        %v2470 = vmul.f32 %v2442, %v1604
        %v2471 = vmul.f32 %v2444, %v1604
        %v2472 = vmul.f32 %v2446, %v1604
        %v2473 = vmul.f32 %v2448, %v1604
        %v2474 = vmul.f32 %v2450, %v1604
        %v2475 = vmul.f32 %v2452, %v1604
        %v2476 = vmul.f32 %v2454, %v1604
        %v2477 = vmul.f32 %v2456, %v1604
        %v2478 = vmul.f32 %v2458, %v1604
        %v2479 = vmul.f32 %v2460, %v1604
        %v2480 = vmul.f32 %v2462, %v1604
        %v2481 = vmul.f32 %v2464, %v1604
        %v2482 = vmul.f32 %v2466, %v1604
        %v2483 = vsub.f32 %v2417, %v2467
        %v2484 = vsub.f32 %v2418, %v2468
        %v2485 = vsub.f32 %v2419, %v2469
        %v2486 = vsub.f32 %v2420, %v2470
        %v2487 = vsub.f32 %v2421, %v2471
        %v2488 = vsub.f32 %v2422, %v2472
        %v2489 = vsub.f32 %v2423, %v2473
        %v2490 = vsub.f32 %v2424, %v2474
        %v2491 = vsub.f32 %v2425, %v2475
        %v2492 = vsub.f32 %v2426, %v2476
        %v2493 = vsub.f32 %v2427, %v2477
        %v2494 = vsub.f32 %v2428, %v2478
        %v2495 = vsub.f32 %v2429, %v2479
        %v2496 = vsub.f32 %v2430, %v2480
        %v2497 = vsub.f32 %v2431, %v2481
        %v2498 = vsub.f32 %v2432, %v2482
        %v2499 = vmul.f32 %v2483, %v2483
        %v2500 = vmul.f32 %v2484, %v2484
        %v2501 = vmul.f32 %v2485, %v2485
        %v2502 = vmul.f32 %v2486, %v2486
        %v2503 = vmul.f32 %v2487, %v2487
        %v2504 = vmul.f32 %v2488, %v2488
        %v2505 = vmul.f32 %v2489, %v2489
        %v2506 = vmul.f32 %v2490, %v2490
        %v2507 = vmul.f32 %v2491, %v2491
        %v2508 = vmul.f32 %v2492, %v2492
        %v2509 = vmul.f32 %v2493, %v2493
        %v2510 = vmul.f32 %v2494, %v2494
        %v2511 = vmul.f32 %v2495, %v2495
        %v2512 = vmul.f32 %v2496, %v2496
        %v2513 = vmul.f32 %v2497, %v2497
        %v2514 = vmul.f32 %v2498, %v2498
        %2515 = vadd.xlane.f32.xlu0 %v2499
        %v2516 = vpop.xlane.xlu0 %2515
        %2517 = vadd.xlane.f32.xlu0 %v2500
        %v2518 = vpop.xlane.xlu0 %2517
        %2519 = vadd.xlane.f32.xlu0 %v2501
        %v2520 = vpop.xlane.xlu0 %2519
        %2521 = vadd.xlane.f32.xlu0 %v2502
        %v2522 = vpop.xlane.xlu0 %2521
        %2523 = vadd.xlane.f32.xlu0 %v2503
        %v2524 = vpop.xlane.xlu0 %2523
        %2525 = vadd.xlane.f32.xlu0 %v2504
        %v2526 = vpop.xlane.xlu0 %2525
        %2527 = vadd.xlane.f32.xlu0 %v2505
        %v2528 = vpop.xlane.xlu0 %2527
        %2529 = vadd.xlane.f32.xlu0 %v2506
        %v2530 = vpop.xlane.xlu0 %2529
        %2531 = vadd.xlane.f32.xlu0 %v2507
        %v2532 = vpop.xlane.xlu0 %2531
        %2533 = vadd.xlane.f32.xlu0 %v2508
        %v2534 = vpop.xlane.xlu0 %2533
        %2535 = vadd.xlane.f32.xlu0 %v2509
        %v2536 = vpop.xlane.xlu0 %2535
        %2537 = vadd.xlane.f32.xlu0 %v2510
        %v2538 = vpop.xlane.xlu0 %2537
        %2539 = vadd.xlane.f32.xlu0 %v2511
        %v2540 = vpop.xlane.xlu0 %2539
        %2541 = vadd.xlane.f32.xlu0 %v2512
        %v2542 = vpop.xlane.xlu0 %2541
        %2543 = vadd.xlane.f32.xlu0 %v2513
        %v2544 = vpop.xlane.xlu0 %2543
        %2545 = vadd.xlane.f32.xlu0 %v2514
        %v2546 = vpop.xlane.xlu0 %2545
        %v2547 = vmul.f32 %v2516, %v1604
        %v2548 = vmul.f32 %v2518, %v1604
        %v2549 = vmul.f32 %v2520, %v1604
        %v2550 = vmul.f32 %v2522, %v1604
        %v2551 = vmul.f32 %v2524, %v1604
        %v2552 = vmul.f32 %v2526, %v1604
        %v2553 = vmul.f32 %v2528, %v1604
        %v2554 = vmul.f32 %v2530, %v1604
        %v2555 = vmul.f32 %v2532, %v1604
        %v2556 = vmul.f32 %v2534, %v1604
        %v2557 = vmul.f32 %v2536, %v1604
        %v2558 = vmul.f32 %v2538, %v1604
        %v2559 = vmul.f32 %v2540, %v1604
        %v2560 = vmul.f32 %v2542, %v1604
        %v2561 = vmul.f32 %v2544, %v1604
        %v2562 = vmul.f32 %v2546, %v1604
        %v2563 = vadd.f32 %v2547, 1e-05
        %v2564 = vadd.f32 %v2548, 1e-05
        %v2565 = vadd.f32 %v2549, 1e-05
        %v2566 = vadd.f32 %v2550, 1e-05
        %v2567 = vadd.f32 %v2551, 1e-05
        %v2568 = vadd.f32 %v2552, 1e-05
        %v2569 = vadd.f32 %v2553, 1e-05
        %v2570 = vadd.f32 %v2554, 1e-05
        %v2571 = vadd.f32 %v2555, 1e-05
        %v2572 = vadd.f32 %v2556, 1e-05
        %v2573 = vadd.f32 %v2557, 1e-05
        %v2574 = vadd.f32 %v2558, 1e-05
        %v2575 = vadd.f32 %v2559, 1e-05
        %v2576 = vadd.f32 %v2560, 1e-05
        %v2577 = vadd.f32 %v2561, 1e-05
        %v2578 = vadd.f32 %v2562, 1e-05
        %v2579 = vrsqrt.pop %v2563
        %v2580 = vmul.f32 %v2579, %v2563
        %v2581 = vmul.f32 %v2580, %v2579
        %v2582 = vmul.f32 0.5, %v2581
        %v2583 = vsub.f32 1.5, %v2582
        %v2584 = vmul.f32 %v2579, %v2583
        %vm2585 = vweird.f32 %v2563
        %vm2586 = vweird.f32 %v2579
        %vm2587 = vmor %vm2585, %vm2586
        %v2588 = vsel %vm2587, %v2579, %v2584
        %v2589 = vrsqrt.pop %v2564
        %v2590 = vmul.f32 %v2589, %v2564
        %v2591 = vmul.f32 %v2590, %v2589
        %v2592 = vmul.f32 0.5, %v2591
        %v2593 = vsub.f32 1.5, %v2592
        %v2594 = vmul.f32 %v2589, %v2593
        %vm2595 = vweird.f32 %v2564
        %vm2596 = vweird.f32 %v2589
        %vm2597 = vmor %vm2595, %vm2596
        %v2598 = vsel %vm2597, %v2589, %v2594
        %v2599 = vrsqrt.pop %v2565
        %v2600 = vmul.f32 %v2599, %v2565
        %v2601 = vmul.f32 %v2600, %v2599
        %v2602 = vmul.f32 0.5, %v2601
        %v2603 = vsub.f32 1.5, %v2602
        %v2604 = vmul.f32 %v2599, %v2603
        %vm2605 = vweird.f32 %v2565
        %vm2606 = vweird.f32 %v2599
        %vm2607 = vmor %vm2605, %vm2606
        %v2608 = vsel %vm2607, %v2599, %v2604
        %v2609 = vrsqrt.pop %v2566
        %v2610 = vmul.f32 %v2609, %v2566
        %v2611 = vmul.f32 %v2610, %v2609
        %v2612 = vmul.f32 0.5, %v2611
        %v2613 = vsub.f32 1.5, %v2612
        %v2614 = vmul.f32 %v2609, %v2613
        %vm2615 = vweird.f32 %v2566
        %vm2616 = vweird.f32 %v2609
        %vm2617 = vmor %vm2615, %vm2616
        %v2618 = vsel %vm2617, %v2609, %v2614
        %v2619 = vrsqrt.pop %v2567
        %v2620 = vmul.f32 %v2619, %v2567
        %v2621 = vmul.f32 %v2620, %v2619
        %v2622 = vmul.f32 0.5, %v2621
        %v2623 = vsub.f32 1.5, %v2622
        %v2624 = vmul.f32 %v2619, %v2623
        %vm2625 = vweird.f32 %v2567
        %vm2626 = vweird.f32 %v2619
        %vm2627 = vmor %vm2625, %vm2626
        %v2628 = vsel %vm2627, %v2619, %v2624
        %v2629 = vrsqrt.pop %v2568
        %v2630 = vmul.f32 %v2629, %v2568
        %v2631 = vmul.f32 %v2630, %v2629
        %v2632 = vmul.f32 0.5, %v2631
        %v2633 = vsub.f32 1.5, %v2632
        %v2634 = vmul.f32 %v2629, %v2633
        %vm2635 = vweird.f32 %v2568
        %vm2636 = vweird.f32 %v2629
        %vm2637 = vmor %vm2635, %vm2636
        %v2638 = vsel %vm2637, %v2629, %v2634
        %v2639 = vrsqrt.pop %v2569
        %v2640 = vmul.f32 %v2639, %v2569
        %v2641 = vmul.f32 %v2640, %v2639
        %v2642 = vmul.f32 0.5, %v2641
        %v2643 = vsub.f32 1.5, %v2642
        %v2644 = vmul.f32 %v2639, %v2643
        %vm2645 = vweird.f32 %v2569
        %vm2646 = vweird.f32 %v2639
        %vm2647 = vmor %vm2645, %vm2646
        %v2648 = vsel %vm2647, %v2639, %v2644
        %v2649 = vrsqrt.pop %v2570
        %v2650 = vmul.f32 %v2649, %v2570
        %v2651 = vmul.f32 %v2650, %v2649
        %v2652 = vmul.f32 0.5, %v2651
        %v2653 = vsub.f32 1.5, %v2652
        %v2654 = vmul.f32 %v2649, %v2653
        %vm2655 = vweird.f32 %v2570
        %vm2656 = vweird.f32 %v2649
        %vm2657 = vmor %vm2655, %vm2656
        %v2658 = vsel %vm2657, %v2649, %v2654
        %v2659 = vrsqrt.pop %v2571
        %v2660 = vmul.f32 %v2659, %v2571
        %v2661 = vmul.f32 %v2660, %v2659
        %v2662 = vmul.f32 0.5, %v2661
        %v2663 = vsub.f32 1.5, %v2662
        %v2664 = vmul.f32 %v2659, %v2663
        %vm2665 = vweird.f32 %v2571
        %vm2666 = vweird.f32 %v2659
        %vm2667 = vmor %vm2665, %vm2666
        %v2668 = vsel %vm2667, %v2659, %v2664
        %v2669 = vrsqrt.pop %v2572
        %v2670 = vmul.f32 %v2669, %v2572
        %v2671 = vmul.f32 %v2670, %v2669
        %v2672 = vmul.f32 0.5, %v2671
        %v2673 = vsub.f32 1.5, %v2672
        %v2674 = vmul.f32 %v2669, %v2673
        %vm2675 = vweird.f32 %v2572
        %vm2676 = vweird.f32 %v2669
        %vm2677 = vmor %vm2675, %vm2676
        %v2678 = vsel %vm2677, %v2669, %v2674
        %v2679 = vrsqrt.pop %v2573
        %v2680 = vmul.f32 %v2679, %v2573
        %v2681 = vmul.f32 %v2680, %v2679
        %v2682 = vmul.f32 0.5, %v2681
        %v2683 = vsub.f32 1.5, %v2682
        %v2684 = vmul.f32 %v2679, %v2683
        %vm2685 = vweird.f32 %v2573
        %vm2686 = vweird.f32 %v2679
        %vm2687 = vmor %vm2685, %vm2686
        %v2688 = vsel %vm2687, %v2679, %v2684
        %v2689 = vrsqrt.pop %v2574
        %v2690 = vmul.f32 %v2689, %v2574
        %v2691 = vmul.f32 %v2690, %v2689
        %v2692 = vmul.f32 0.5, %v2691
        %v2693 = vsub.f32 1.5, %v2692
        %v2694 = vmul.f32 %v2689, %v2693
        %vm2695 = vweird.f32 %v2574
        %vm2696 = vweird.f32 %v2689
        %vm2697 = vmor %vm2695, %vm2696
        %v2698 = vsel %vm2697, %v2689, %v2694
        %v2699 = vrsqrt.pop %v2575
        %v2700 = vmul.f32 %v2699, %v2575
        %v2701 = vmul.f32 %v2700, %v2699
        %v2702 = vmul.f32 0.5, %v2701
        %v2703 = vsub.f32 1.5, %v2702
        %v2704 = vmul.f32 %v2699, %v2703
        %vm2705 = vweird.f32 %v2575
        %vm2706 = vweird.f32 %v2699
        %vm2707 = vmor %vm2705, %vm2706
        %v2708 = vsel %vm2707, %v2699, %v2704
        %v2709 = vrsqrt.pop %v2576
        %v2710 = vmul.f32 %v2709, %v2576
        %v2711 = vmul.f32 %v2710, %v2709
        %v2712 = vmul.f32 0.5, %v2711
        %v2713 = vsub.f32 1.5, %v2712
        %v2714 = vmul.f32 %v2709, %v2713
        %vm2715 = vweird.f32 %v2576
        %vm2716 = vweird.f32 %v2709
        %vm2717 = vmor %vm2715, %vm2716
        %v2718 = vsel %vm2717, %v2709, %v2714
        %v2719 = vrsqrt.pop %v2577
        %v2720 = vmul.f32 %v2719, %v2577
        %v2721 = vmul.f32 %v2720, %v2719
        %v2722 = vmul.f32 0.5, %v2721
        %v2723 = vsub.f32 1.5, %v2722
        %v2724 = vmul.f32 %v2719, %v2723
        %vm2725 = vweird.f32 %v2577
        %vm2726 = vweird.f32 %v2719
        %vm2727 = vmor %vm2725, %vm2726
        %v2728 = vsel %vm2727, %v2719, %v2724
        %v2729 = vrsqrt.pop %v2578
        %v2730 = vmul.f32 %v2729, %v2578
        %v2731 = vmul.f32 %v2730, %v2729
        %v2732 = vmul.f32 0.5, %v2731
        %v2733 = vsub.f32 1.5, %v2732
        %v2734 = vmul.f32 %v2729, %v2733
        %vm2735 = vweird.f32 %v2578
        %vm2736 = vweird.f32 %v2729
        %vm2737 = vmor %vm2735, %vm2736
        %v2738 = vsel %vm2737, %v2729, %v2734
        %v2739 = vmul.f32 %v2483, %v2588
        %v2740 = vmul.f32 %v2484, %v2598
        %v2741 = vmul.f32 %v2485, %v2608
        %v2742 = vmul.f32 %v2486, %v2618
        %v2743 = vmul.f32 %v2487, %v2628
        %v2744 = vmul.f32 %v2488, %v2638
        %v2745 = vmul.f32 %v2489, %v2648
        %v2746 = vmul.f32 %v2490, %v2658
        %v2747 = vmul.f32 %v2491, %v2668
        %v2748 = vmul.f32 %v2492, %v2678
        %v2749 = vmul.f32 %v2493, %v2688
        %v2750 = vmul.f32 %v2494, %v2698
        %v2751 = vmul.f32 %v2495, %v2708
        %v2752 = vmul.f32 %v2496, %v2718
        %v2753 = vmul.f32 %v2497, %v2728
        %v2754 = vmul.f32 %v2498, %v2738
        %v2756 = vperm.slane %v2433, 0
        %v2758 = vmul.f32 %v2739, %v2756
        %v2759 = vmul.f32 %v2740, %v2756
        %v2760 = vmul.f32 %v2741, %v2756
        %v2761 = vmul.f32 %v2742, %v2756
        %v2762 = vmul.f32 %v2743, %v2756
        %v2763 = vmul.f32 %v2744, %v2756
        %v2764 = vmul.f32 %v2745, %v2756
        %v2765 = vmul.f32 %v2746, %v2756
        %v2766 = vmul.f32 %v2747, %v2756
        %v2767 = vmul.f32 %v2748, %v2756
        %v2768 = vmul.f32 %v2749, %v2756
        %v2769 = vmul.f32 %v2750, %v2756
        %v2770 = vmul.f32 %v2751, %v2756
        %v2771 = vmul.f32 %v2752, %v2756
        %v2772 = vmul.f32 %v2753, %v2756
        %v2773 = vmul.f32 %v2754, %v2756
        %v2775 = vperm.slane %v2434, 0
        %v2777 = vadd.f32 %v2758, %v2775
        %v2778 = vadd.f32 %v2759, %v2775
        %v2779 = vadd.f32 %v2760, %v2775
        %v2780 = vadd.f32 %v2761, %v2775
        %v2781 = vadd.f32 %v2762, %v2775
        %v2782 = vadd.f32 %v2763, %v2775
        %v2783 = vadd.f32 %v2764, %v2775
        %v2784 = vadd.f32 %v2765, %v2775
        %v2785 = vadd.f32 %v2766, %v2775
        %v2786 = vadd.f32 %v2767, %v2775
        %v2787 = vadd.f32 %v2768, %v2775
        %v2788 = vadd.f32 %v2769, %v2775
        %v2789 = vadd.f32 %v2770, %v2775
        %v2790 = vadd.f32 %v2771, %v2775
        %v2791 = vadd.f32 %v2772, %v2775
        %v2792 = vadd.f32 %v2773, %v2775
        %2793 = vst [vmem:[%s480] sm:$0xff] %v2777
        %2794 = vst [vmem:[%s480 + $0x8] sm:$0xff] %v2778
        %2795 = vst [vmem:[%s480 + $0x10] sm:$0xff] %v2779
        %2796 = vst [vmem:[%s480 + $0x18] sm:$0xff] %v2780
        %2797 = vst [vmem:[%s480 + $0x20] sm:$0xff] %v2781
        %2798 = vst [vmem:[%s480 + $0x28] sm:$0xff] %v2782
        %2799 = vst [vmem:[%s480 + $0x30] sm:$0xff] %v2783
        %2800 = vst [vmem:[%s480 + $0x38] sm:$0xff] %v2784
        %2801 = vst [vmem:[%s480 + $0x40] sm:$0xff] %v2785
        %2802 = vst [vmem:[%s480 + $0x48] sm:$0xff] %v2786
        %2803 = vst [vmem:[%s480 + $0x50] sm:$0xff] %v2787
        %2804 = vst [vmem:[%s480 + $0x58] sm:$0xff] %v2788
        %2805 = vst [vmem:[%s480 + $0x60] sm:$0xff] %v2789
        %2806 = vst [vmem:[%s480 + $0x68] sm:$0xff] %v2790
        %2807 = vst [vmem:[%s480 + $0x70] sm:$0xff] %v2791
        %2808 = vst [vmem:[%s480 + $0x78] sm:$0xff] %v2792
        %2809 = vst [vmem:[%s487] sm:$0xf] %v1245
        %2810 = vst [vmem:[%s487 + $0x4] sm:$0xf] %v1246
        %2811 = vst [vmem:[%s487 + $0x8] sm:$0xf] %v1247
        %2812 = vst [vmem:[%s487 + $0xc] sm:$0xf] %v1248
        %2813 = vst [vmem:[%s487 + $0x10] sm:$0xf] %v1249
        %2814 = vst [vmem:[%s487 + $0x14] sm:$0xf] %v1250
        %2815 = vst [vmem:[%s487 + $0x18] sm:$0xf] %v1251
        %2816 = vst [vmem:[%s487 + $0x1c] sm:$0xf] %v1252
        %2817 = vst [vmem:[%s487 + $0x20] sm:$0xf] %v1253
        %2818 = vst [vmem:[%s487 + $0x24] sm:$0xf] %v1254
        %2819 = vst [vmem:[%s487 + $0x28] sm:$0xf] %v1255
        %2820 = vst [vmem:[%s487 + $0x2c] sm:$0xf] %v1256
        %2821 = vst [vmem:[%s487 + $0x30] sm:$0xf] %v1257
        %2822 = vst [vmem:[%s487 + $0x34] sm:$0xf] %v1258
        %2823 = vst [vmem:[%s487 + $0x38] sm:$0xf] %v1259
        %2824 = vst [vmem:[%s487 + $0x3c] sm:$0xf] %v1260
        %s2825 = sand.u32 %s332, 1
        %s2826 = scalar_lea.sflag [#allocation4], %s2825
        %s2827 = sand.u32 %s332, 1
        %s2828 = smul.addr %s2827, 128
        %s2829 = scalar_lea.vmem [#allocation3], %s2828
        %s2830 = sand.u32 %s360, 1
        %s2831 = scalar_lea.sflag [#allocation6], %s2830
        %s2832 = sand.u32 %s360, 1
        %s2833 = smul.addr %s2832, 64
        %s2834 = scalar_lea.vmem [#allocation5], %s2833
        // Predicated region
        $region77: #{vc_encoder_layer.1} parent=71 // pred_check
          %p2835 = pneg %p342
        $region78: #{vc_encoder_layer.1} parent=71 // pred_check_branch
          %2837 = sbr.rel (%p2835) target = $region80
        $region79: #{vc_encoder_layer.1} parent=71 // pred_region
          %s2838 = smul.u32 16, %s37
          %2840 = vsyncadd %s2826, 0
          %s2841 = smul.addr %s36, 16
          %s2842 = sadd.s32 %s2838, %s2841
          %s2843 = smul.addr %s2842, 8
          %s2844 = scalar_lea.hbm %s13, %s2843
          %s2845 = sshll.u32 %s2829, 4
          %s2846 = int_to_ptr.vmem [resolvable:$true] %s2845
          %s2847 = sshll.u32 %s2844, 4
          %s2848 = int_to_ptr.hbm [resolvable:$true] %s2847
          %2853 = dma.vmem_to_hbm [thread:$0]  %s2846, 2048, %s2848, %s2826, 128, 128, 8
        $region80: #{vc_encoder_layer.1} parent=71 // pred_fallthru
          _
        // Predicated region
        $region81: #{vc_encoder_layer.1} parent=71 // pred_check
          %p2854 = pneg %p370
        $region82: #{vc_encoder_layer.1} parent=71 // pred_check_branch
          %2856 = sbr.rel (%p2854) target = $region84
        $region83: #{vc_encoder_layer.1} parent=71 // pred_region
          %s2857 = smul.u32 16, %s37
          %2859 = vsyncadd %s2831, 0
          %s2860 = smul.addr %s36, 16
          %s2861 = sadd.s32 %s2857, %s2860
          %s2862 = smul.addr %s2861, 4
          %s2863 = scalar_lea.hbm %s14, %s2862
          %s2864 = sshll.u32 %s2834, 4
          %s2865 = int_to_ptr.vmem [resolvable:$true] %s2864
          %s2866 = sshll.u32 %s2863, 4
          %s2867 = int_to_ptr.hbm [resolvable:$true] %s2866
          %2872 = dma.vmem_to_hbm [thread:$0]  %s2865, 1024, %s2867, %s2831, 64, 64, 4
        $region84: #{vc_encoder_layer.1} parent=71 // pred_fallthru
          _
      $region72: #{vc_encoder_layer.1} parent=5 // pred_fallthru
        _
      %p2873 = scmp.le.s32.totalorder 2, %s27
      // Predicated region
      $region85: #{vc_encoder_layer.1} parent=5 // pred_check
        %p2874 = pneg %p2873
      $region86: #{vc_encoder_layer.1} parent=5 // pred_check_branch
        %2876 = sbr.rel (%p2874) target = $region88
      $region87: #{vc_encoder_layer.1} parent=5 // pred_region
        %s2877 = ssub.s32 %s27, 2
        // Predicated region
        $region89: #{vc_encoder_layer.1} parent=87 // pred_check
          %p2878 = pneg %p348
        $region90: #{vc_encoder_layer.1} parent=87 // pred_check_branch
          %2880 = sbr.rel (%p2878) target = $region92
        $region91: #{vc_encoder_layer.1} parent=87 // pred_region
          %s2881 = sand.u32 %s333, 1
          %s2882 = scalar_lea.sflag [#allocation4], %s2881
          %s2883 = sand.u32 %s333, 1
          %s2884 = smul.addr %s2883, 128
          %s2885 = scalar_lea.vmem [#allocation3], %s2884
          %2887 = dma.done %s2882, 2048
        $region92: #{vc_encoder_layer.1} parent=87 // pred_fallthru
          _
        // Predicated region
        $region93: #{vc_encoder_layer.1} parent=87 // pred_check
          %p2888 = pneg %p376
        $region94: #{vc_encoder_layer.1} parent=87 // pred_check_branch
          %2890 = sbr.rel (%p2888) target = $region96
        $region95: #{vc_encoder_layer.1} parent=87 // pred_region
          %s2891 = sand.u32 %s361, 1
          %s2892 = scalar_lea.sflag [#allocation6], %s2891
          %s2893 = sand.u32 %s361, 1
          %s2894 = smul.addr %s2893, 64
          %s2895 = scalar_lea.vmem [#allocation5], %s2894
          %2897 = dma.done %s2892, 1024
        $region96: #{vc_encoder_layer.1} parent=87 // pred_fallthru
          _
      $region88: #{vc_encoder_layer.1} parent=5 // pred_fallthru
        _
    $region6: #{vc_encoder_layer.1} parent=1 // loop_footer
      %s31 = sadd.s32 1, %s27
    $region7: #{vc_encoder_layer.1} parent=1 // loop_footer_branch
      %26 = sbr.rel target = $region3
    $region8: #{vc_encoder_layer.1} parent=1 // loop_exit
      _
    %2898 = vsyncpa [#allocation4], 1
    %s2899 = scalar_lea.sflag [#allocation4], 1
    %2900 = vsyncpa %s2899, 1
    %2901 = vsyncpa [#allocation6], 1
    %s2902 = scalar_lea.sflag [#allocation6], 1
    %2903 = vsyncpa %s2902, 1

</llo_original>
